<compile_context>
chip_gen: v7x
topology: tpu7x:2x2x1
jax: 0.10.0
libtpu: 0.0.40
codegen_flags: <defaults>
</compile_context>

<pallas_src>
import functools

import jax
import jax.numpy as jnp
from jax.experimental import pallas as pl
from jax.experimental.pallas import tpu as pltpu


def attention_kernel(enc_ref, hid_ref, w1a_ref, w1b_ref, b1_ref,
                     w2_ref, b2_ref, w3_ref, ctx_ref, *, seq_valid):
    f32 = jnp.float32
    BT, Sp, H = enc_ref.shape          # batch tile, padded seq, hidden
    R = BT * Sp
    mxu_dt = w1a_ref.dtype             # bf16 fast path or f32 exact path

    enc3 = enc_ref[...]                # (BT, Sp, H), compute dtype
    enc2 = enc3.reshape(R, H)          # layout-preserving merge (Sp % 8 == 0)

    # Hoisted hidden projection: ONE (BT,H)x(H,H) MXU matmul, f32 accumulation.
    hid_proj = (jnp.dot(hid_ref[...], w1b_ref[...], preferred_element_type=f32)
                + b1_ref[...])                                       # (BT, H) f32

    # Replicate each batch's projected hidden row to its Sp sequence rows via a
    # tiny 0/1 segment matmul (costs ~BT/H of the main matmuls for small BT).
    r_idx = jax.lax.broadcasted_iota(jnp.int32, (R, BT), 0)
    b_idx = jax.lax.broadcasted_iota(jnp.int32, (R, BT), 1)
    seg_rb = ((r_idx >= b_idx * Sp) & (r_idx < (b_idx + 1) * Sp)).astype(f32)
    hid_rep = jnp.dot(seg_rb, hid_proj, preferred_element_type=f32)  # (R, H)

    # 3-layer MLP over all rows at once.  Linear(2H->H) on the concat is
    # mathematically enc @ W1a + hid @ W1b + b1.
    h1 = jnp.maximum(
        jnp.dot(enc2, w1a_ref[...], preferred_element_type=f32) + hid_rep, 0.0)
    h2 = jnp.maximum(
        jnp.dot(h1.astype(mxu_dt), w2_ref[...], preferred_element_type=f32)
        + b2_ref[...], 0.0)                                          # (R, H) f32

    # Linear(H->1, bias=False): VPU multiply + lane reduce (MXU stays free).
    scores = jnp.sum(h2 * w3_ref[...], axis=-1, keepdims=True)       # (R, 1) f32

    # Per-batch numerically stable softmax over the seq axis.  The row axis is
    # split back into (batch, seq) -- layout preserving since Sp % 8 == 0 -- so
    # the max/sum are sublane reduces and the max is PER BATCH (no NaN hazard
    # from one batch flushing another batch's exponentials to zero).
    s3 = scores.reshape(BT, Sp, 1)
    if Sp != seq_valid:                # static branch: mask padded seq rows
        s_pos = jax.lax.broadcasted_iota(jnp.int32, (BT, Sp, 1), 1)
        s3 = jnp.where(s_pos < seq_valid, s3, -jnp.inf)
    m = jnp.max(s3, axis=1, keepdims=True)                           # (BT, 1, 1)
    e = jnp.exp(s3 - m)                                              # (BT, Sp, 1)
    denom = jnp.sum(e, axis=1, keepdims=True)                        # (BT, 1, 1)
    inv = pl.reciprocal(denom, approx=True)                          # EUP vrcp
    inv = inv * (2.0 - denom * inv)        # one Newton step -> ~f32 accuracy
    attn = e * inv                                                   # (BT, Sp, 1)

    # context[b,:] = sum_s attn[b,s] * enc[b,s,:]: VPU mul + sublane reduce.
    ctx = jnp.sum(attn * enc3.astype(f32), axis=1, keepdims=True)    # (BT, 1, H)
    ctx_ref[...] = ctx.astype(ctx_ref.dtype)


def _choose_block_b(B, Sp, H, itemsize):
    """Sublane-aligned (multiple of 8) batch tile.

    Grow the tile while the doubled encoder tile stays under ~2 MiB (measured
    HBM-roofline sweet spot) and at least 8 grid steps would remain for
    DMA/compute overlap and v7x megacore sharding.
    """
    bb = 8
    while (2 * bb * Sp * H * itemsize <= 2 * 1024 * 1024) and (B >= 16 * bb):
        bb *= 2
    return bb


def _vmem_limit_bytes(block_b, Sp, H, x_itemsize, out_itemsize):
    enc = 2 * block_b * Sp * H * x_itemsize      # double-buffered encoder stream
    hid = 2 * block_b * H * x_itemsize           # double-buffered hidden tile
    out = 2 * block_b * H * out_itemsize         # double-buffered output tile
    wgt = 2 * (3 * H * H + 3 * H) * 4            # weights (budget worst case)
    tmp = 8 * block_b * Sp * H * 4               # f32 intermediates headroom
    need = enc + hid + out + wgt + tmp
    # Floor at v5e's 16 MiB scoped default, ceiling at v7x's 64 MiB physical VMEM.
    return int(min(max(2 * need, 16 * 1024 * 1024), 64 * 1024 * 1024))


def attention_forward(hidden_state, encoder_outputs, params, *,
                      block_b=None, compute_dtype=jnp.float32):
    """hidden_state: (B, 1, H), encoder_outputs: (B, S, H) -> context (B, H).

    compute_dtype controls the dtype fed to the MXU for the streamed
    activations and the HxH weights (use jnp.bfloat16 for the fast path);
    accumulation, biases, softmax and the context sum stay float32.
    """
    w1a, w1b, b1, w2, b2, w3 = params
    B, S, H = encoder_outputs.shape
    out_dtype = encoder_outputs.dtype
    cdt = jnp.dtype(compute_dtype)

    # ---- tiling ----------------------------------------------------------------
    Sp = ((S + 7) // 8) * 8                          # seq padded to a sublane tile
    if block_b is None:
        block_b = _choose_block_b(B, Sp, H, cdt.itemsize)
    block_b = max(8, ((int(block_b) + 7) // 8) * 8)  # sublane-aligned batch tile
    num_steps = max(2, -(-B // block_b))             # >= 2 steps: megacore + pipeline
    Bp = num_steps * block_b

    # ---- host-side cast + zero padding (cheap XLA ops, sliced off at the end) ---
    enc_in = encoder_outputs.astype(cdt)
    hid_in = hidden_state.reshape(B, H).astype(cdt)
    if (Bp, Sp) != (B, S):
        enc_in = jnp.pad(enc_in, ((0, Bp - B), (0, Sp - S), (0, 0)))
        hid_in = jnp.pad(hid_in, ((0, Bp - B), (0, 0)))
    w1a_c = w1a.astype(cdt)
    w1b_c = w1b.astype(cdt)
    w2_c = w2.astype(cdt)
    b1_f = b1.reshape(1, H).astype(jnp.float32)
    b2_f = b2.reshape(1, H).astype(jnp.float32)
    w3_row = w3.reshape(1, H).astype(jnp.float32)

    vmem_limit = _vmem_limit_bytes(block_b, Sp, H, cdt.itemsize,
                                   jnp.dtype(out_dtype).itemsize)
    kernel = functools.partial(attention_kernel, seq_valid=S)

    def run(single_buffer_weights):
        wkw = ({"pipeline_mode": pl.Buffered(1)} if single_buffer_weights else {})
        const = lambda shape: pl.BlockSpec(shape, lambda i: (0,) * len(shape), **wkw)
        grid_spec = pltpu.PrefetchScalarGridSpec(
            num_scalar_prefetch=0,
            grid=(num_steps,),
            in_specs=[
                pl.BlockSpec((block_b, Sp, H), lambda i: (i, 0, 0)),   # encoder tile
                pl.BlockSpec((block_b, H), lambda i: (i, 0)),          # hidden tile
                const((H, H)),                                         # W1, enc half
                const((H, H)),                                         # W1, hid half
                const((1, H)),                                         # b1
                const((H, H)),                                         # W2
                const((1, H)),                                         # b2
                const((1, H)),                                         # w3 row
            ],
            out_specs=pl.BlockSpec((block_b, 1, H), lambda i: (i, 0, 0)),
        )
        return pl.pallas_call(
            kernel,
            out_shape=jax.ShapeDtypeStruct((Bp, 1, H), out_dtype),
            grid_spec=grid_spec,
            compiler_params=pltpu.CompilerParams(
                dimension_semantics=("parallel",),
                vmem_limit_bytes=vmem_limit),
        )(enc_in, hid_in, w1a_c, w1b_c, b1_f, w2_c, b2_f, w3_row)

    if hasattr(pl, "Buffered"):
        try:
            out = run(True)          # single-buffer the constant weight operands
        except Exception:            # pipeline_mode unsupported on this JAX version
            out = run(False)
    else:
        out = run(False)

    return out.reshape(Bp, H)[:B]


def reference_forward(hidden_state, encoder_outputs, params):
    """Pure-JAX reference mirroring the PyTorch module (high-precision matmuls)."""
    w1a, w1b, b1, w2, b2, w3 = params
    B, S, H = encoder_outputs.shape
    hp = jax.lax.Precision.HIGHEST
    hid_rep = jnp.broadcast_to(hidden_state.reshape(B, 1, H), (B, S, H))
    combined = jnp.concatenate([encoder_outputs, hid_rep], axis=2)   # (B, S, 2H)
    w1 = jnp.concatenate([w1a, w1b], axis=0)                         # (2H, H)
    h1 = jax.nn.relu(jnp.dot(combined.reshape(-1, 2 * H), w1, precision=hp) + b1)
    h2 = jax.nn.relu(jnp.dot(h1, w2, precision=hp) + b2)
    scores = jnp.dot(h2, w3, precision=hp).reshape(B, S)
    attn = jax.nn.softmax(scores, axis=1)
    ctx = jnp.einsum("bs,bsh->bh", attn, encoder_outputs, precision=hp)
    return ctx


def init_params(key, hidden_size):
    H = hidden_size
    ks = jax.random.split(key, 5)
    scale1 = 1.0 / jnp.sqrt(2.0 * H)
    scale2 = 1.0 / jnp.sqrt(1.0 * H)
    w1 = jax.random.uniform(ks[0], (2 * H, H), jnp.float32, -scale1, scale1)
    b1 = jax.random.uniform(ks[1], (1, H), jnp.float32, -scale1, scale1)
    w2 = jax.random.uniform(ks[2], (H, H), jnp.float32, -scale2, scale2)
    b2 = jax.random.uniform(ks[3], (1, H), jnp.float32, -scale2, scale2)
    w3 = jax.random.uniform(ks[4], (H, 1), jnp.float32, -scale2, scale2)
    # Split the 2H->H weight for the concat-free formulation.
    return (w1[:H], w1[H:], b1, w2, b2, w3)


if __name__ == "__main__":
    B, S, H = 2, 8, 32
    key = jax.random.PRNGKey(0)
    k_enc, k_hid, k_par = jax.random.split(key, 3)

    encoder_outputs = jax.random.normal(k_enc, (B, S, H), jnp.float32)
    hidden_state = jax.random.normal(k_hid, (B, 1, H), jnp.float32)
    params = init_params(k_par, H)

    ref = reference_forward(hidden_state, encoder_outputs, params)

    # Exact path: float32 operands on the MXU.
    ctx_f32 = attention_forward(hidden_state, encoder_outputs, params,
                                compute_dtype=jnp.float32)
    ctx_f32 = jax.block_until_ready(ctx_f32)
    assert ctx_f32.shape == (B, H)
    assert jnp.allclose(ctx_f32, ref, atol=5e-3, rtol=5e-3)

    # Fast path: bfloat16 operands on the MXU (f32 accumulation + f32 softmax).
    ctx_bf16 = attention_forward(hidden_state, encoder_outputs, params,
                                 compute_dtype=jnp.bfloat16)
    ctx_bf16 = jax.block_until_ready(ctx_bf16)
    assert ctx_bf16.shape == (B, H)
    assert jnp.allclose(ctx_bf16, ref, atol=3e-2, rtol=3e-2)

    print("KERNEL_OK")
</pallas_src>

<mosaic_0001>
module attributes {stable_mosaic.version = 11 : i64} {
  func.func @attention_kernel(%arg0: i32, %arg1: memref<8x8x32xf32, #tpu.memory_space<vmem>>, %arg2: memref<8x32xf32, #tpu.memory_space<vmem>>, %arg3: memref<32x32xf32, #tpu.memory_space<vmem>>, %arg4: memref<32x32xf32, #tpu.memory_space<vmem>>, %arg5: memref<1x32xf32, #tpu.memory_space<vmem>>, %arg6: memref<32x32xf32, #tpu.memory_space<vmem>>, %arg7: memref<1x32xf32, #tpu.memory_space<vmem>>, %arg8: memref<1x32xf32, #tpu.memory_space<vmem>>, %arg9: memref<8x1x32xf32, #tpu.memory_space<vmem>>) attributes {dimension_semantics = [#tpu.dimension_semantics<parallel>], iteration_bounds = array<i64: 2>, scalar_prefetch = 0 : i64, scratch_operands = 0 : i64, tpu.core_type = #tpu.core_type<tc>, window_params = [{transform_indices = @transform_0, window_bounds = array<i64: 8, 8, 32>}, {transform_indices = @transform_1, window_bounds = array<i64: 8, 32>}, {pipeline_mode = #tpu.pipeline_mode<synchronous>, transform_indices = @transform_2, window_bounds = array<i64: 32, 32>}, {pipeline_mode = #tpu.pipeline_mode<synchronous>, transform_indices = @transform_3, window_bounds = array<i64: 32, 32>}, {pipeline_mode = #tpu.pipeline_mode<synchronous>, transform_indices = @transform_4, window_bounds = array<i64: 1, 32>}, {pipeline_mode = #tpu.pipeline_mode<synchronous>, transform_indices = @transform_5, window_bounds = array<i64: 32, 32>}, {pipeline_mode = #tpu.pipeline_mode<synchronous>, transform_indices = @transform_6, window_bounds = array<i64: 1, 32>}, {pipeline_mode = #tpu.pipeline_mode<synchronous>, transform_indices = @transform_7, window_bounds = array<i64: 1, 32>}, {transform_indices = @transform_8, window_bounds = array<i64: 8, 1, 32>}]} {
    %c0 = arith.constant 0 : index
    %c0_0 = arith.constant 0 : index
    %c0_1 = arith.constant 0 : index
    %0 = vector.load %arg1[%c0, %c0_0, %c0_1] : memref<8x8x32xf32, #tpu.memory_space<vmem>>, vector<8x8x32xf32>
    %1 = vector.shape_cast %0 : vector<8x8x32xf32> to vector<64x32xf32>
    %c0_2 = arith.constant 0 : index
    %c0_3 = arith.constant 0 : index
    %2 = vector.load %arg2[%c0_2, %c0_3] : memref<8x32xf32, #tpu.memory_space<vmem>>, vector<8x32xf32>
    %c0_4 = arith.constant 0 : index
    %c0_5 = arith.constant 0 : index
    %3 = vector.load %arg4[%c0_4, %c0_5] : memref<32x32xf32, #tpu.memory_space<vmem>>, vector<32x32xf32>
    %cst = arith.constant dense<0.000000e+00> : vector<8x32xf32>
    %4 = tpu.matmul %2, %3, %cst {dimension_numbers = #tpu.dot_dimension_numbers<[1], [0], [0], [1], [0, 0, 1, 1], [], []>} : vector<8x32xf32>, vector<32x32xf32>, vector<8x32xf32> -> vector<8x32xf32>
    %c0_6 = arith.constant 0 : index
    %c0_7 = arith.constant 0 : index
    %5 = vector.load %arg5[%c0_6, %c0_7] : memref<1x32xf32, #tpu.memory_space<vmem>>, vector<1x32xf32>
    %6 = vector.broadcast %5 : vector<1x32xf32> to vector<8x32xf32>
    %7 = arith.addf %4, %6 : vector<8x32xf32>
    %8 = tpu.iota {dimensions = array<i32: 0>} : vector<64x8xi32>
    %9 = tpu.iota {dimensions = array<i32: 1>} : vector<64x8xi32>
    %c8_i32 = arith.constant 8 : i32
    %10 = vector.broadcast %c8_i32 : i32 to vector<64x8xi32>
    %11 = arith.muli %9, %10 : vector<64x8xi32>
    %12 = arith.cmpi sge, %8, %11 : vector<64x8xi32>
    %c1_i32 = arith.constant 1 : i32
    %13 = vector.broadcast %c1_i32 : i32 to vector<64x8xi32>
    %14 = arith.addi %9, %13 : vector<64x8xi32>
    %c8_i32_8 = arith.constant 8 : i32
    %15 = vector.broadcast %c8_i32_8 : i32 to vector<64x8xi32>
    %16 = arith.muli %14, %15 : vector<64x8xi32>
    %17 = arith.cmpi slt, %8, %16 : vector<64x8xi32>
    %18 = arith.andi %12, %17 : vector<64x8xi1>
    %19 = arith.extui %18 : vector<64x8xi1> to vector<64x8xi32>
    %20 = arith.sitofp %19 : vector<64x8xi32> to vector<64x8xf32>
    %cst_9 = arith.constant dense<0.000000e+00> : vector<64x32xf32>
    %21 = tpu.matmul %20, %7, %cst_9 {dimension_numbers = #tpu.dot_dimension_numbers<[1], [0], [0], [1], [0, 0, 1, 1], [], []>} : vector<64x8xf32>, vector<8x32xf32>, vector<64x32xf32> -> vector<64x32xf32>
    %c0_10 = arith.constant 0 : index
    %c0_11 = arith.constant 0 : index
    %22 = vector.load %arg3[%c0_10, %c0_11] : memref<32x32xf32, #tpu.memory_space<vmem>>, vector<32x32xf32>
    %cst_12 = arith.constant dense<0.000000e+00> : vector<64x32xf32>
    %23 = tpu.matmul %1, %22, %cst_12 {dimension_numbers = #tpu.dot_dimension_numbers<[1], [0], [0], [1], [0, 0, 1, 1], [], []>} : vector<64x32xf32>, vector<32x32xf32>, vector<64x32xf32> -> vector<64x32xf32>
    %24 = arith.addf %23, %21 : vector<64x32xf32>
    %cst_13 = arith.constant 0.000000e+00 : f32
    %25 = vector.broadcast %cst_13 : f32 to vector<64x32xf32>
    %26 = arith.maximumf %24, %25 : vector<64x32xf32>
    %c0_14 = arith.constant 0 : index
    %c0_15 = arith.constant 0 : index
    %27 = vector.load %arg6[%c0_14, %c0_15] : memref<32x32xf32, #tpu.memory_space<vmem>>, vector<32x32xf32>
    %cst_16 = arith.constant dense<0.000000e+00> : vector<64x32xf32>
    %28 = tpu.matmul %26, %27, %cst_16 {dimension_numbers = #tpu.dot_dimension_numbers<[1], [0], [0], [1], [0, 0, 1, 1], [], []>} : vector<64x32xf32>, vector<32x32xf32>, vector<64x32xf32> -> vector<64x32xf32>
    %c0_17 = arith.constant 0 : index
    %c0_18 = arith.constant 0 : index
    %29 = vector.load %arg7[%c0_17, %c0_18] : memref<1x32xf32, #tpu.memory_space<vmem>>, vector<1x32xf32>
    %30 = vector.broadcast %29 : vector<1x32xf32> to vector<64x32xf32>
    %31 = arith.addf %28, %30 : vector<64x32xf32>
    %cst_19 = arith.constant 0.000000e+00 : f32
    %32 = vector.broadcast %cst_19 : f32 to vector<64x32xf32>
    %33 = arith.maximumf %31, %32 : vector<64x32xf32>
    %c0_20 = arith.constant 0 : index
    %c0_21 = arith.constant 0 : index
    %34 = vector.load %arg8[%c0_20, %c0_21] : memref<1x32xf32, #tpu.memory_space<vmem>>, vector<1x32xf32>
    %35 = vector.broadcast %34 : vector<1x32xf32> to vector<64x32xf32>
    %36 = arith.mulf %33, %35 : vector<64x32xf32>
    %cst_22 = arith.constant dense<0.000000e+00> : vector<64xf32>
    %37 = vector.multi_reduction <add>, %36, %cst_22 [1] : vector<64x32xf32> to vector<64xf32>
    %38 = vector.shape_cast %37 : vector<64xf32> to vector<64x1xf32>
    %39 = vector.shape_cast %38 : vector<64x1xf32> to vector<8x8x1xf32>
    %cst_23 = arith.constant dense<0xFF800000> : vector<8x1xf32>
    %40 = vector.multi_reduction <maximumf>, %39, %cst_23 [1] : vector<8x8x1xf32> to vector<8x1xf32>
    %41 = vector.shape_cast %40 : vector<8x1xf32> to vector<8x1x1xf32>
    %42 = vector.broadcast %41 : vector<8x1x1xf32> to vector<8x8x1xf32>
    %43 = arith.subf %39, %42 : vector<8x8x1xf32>
    %44 = math.exp %43 : vector<8x8x1xf32>
    %cst_24 = arith.constant dense<0.000000e+00> : vector<8x1xf32>
    %45 = vector.multi_reduction <add>, %44, %cst_24 [1] : vector<8x8x1xf32> to vector<8x1xf32>
    %46 = vector.shape_cast %45 : vector<8x1xf32> to vector<8x1x1xf32>
    %47 = tpu.reciprocal %46 {approx = true} : vector<8x1x1xf32> -> vector<8x1x1xf32>
    %48 = arith.mulf %46, %47 : vector<8x1x1xf32>
    %cst_25 = arith.constant 2.000000e+00 : f32
    %49 = vector.broadcast %cst_25 : f32 to vector<8x1x1xf32>
    %50 = arith.subf %49, %48 : vector<8x1x1xf32>
    %51 = arith.mulf %47, %50 : vector<8x1x1xf32>
    %52 = vector.broadcast %51 : vector<8x1x1xf32> to vector<8x8x1xf32>
    %53 = arith.mulf %44, %52 : vector<8x8x1xf32>
    %54 = vector.broadcast %53 : vector<8x8x1xf32> to vector<8x8x32xf32>
    %55 = arith.mulf %54, %0 : vector<8x8x32xf32>
    %cst_26 = arith.constant dense<0.000000e+00> : vector<8x32xf32>
    %56 = vector.multi_reduction <add>, %55, %cst_26 [1] : vector<8x8x32xf32> to vector<8x32xf32>
    %57 = vector.shape_cast %56 : vector<8x32xf32> to vector<8x1x32xf32>
    %c0_27 = arith.constant 0 : index
    %c0_28 = arith.constant 0 : index
    %c0_29 = arith.constant 0 : index
    %58 = vector.load %arg9[%c0_27, %c0_28, %c0_29] : memref<8x1x32xf32, #tpu.memory_space<vmem>>, vector<8x1x32xf32>
    tpu.vector_store %arg9[%c0_27, %c0_28, %c0_29], %57 {strides = array<i32>} : memref<8x1x32xf32, #tpu.memory_space<vmem>>, vector<8x1x32xf32>,
    return
  }
  func.func @transform_0(%arg0: i32) -> (i32, i32, i32) {
    %c0_i32 = arith.constant 0 : i32
    %c0_i32_0 = arith.constant 0 : i32
    %c0_i32_1 = arith.constant 0 : i32
    return %arg0, %c0_i32, %c0_i32_0 : i32, i32, i32
  }
  func.func @transform_1(%arg0: i32) -> (i32, i32) {
    %c0_i32 = arith.constant 0 : i32
    %c0_i32_0 = arith.constant 0 : i32
    return %arg0, %c0_i32 : i32, i32
  }
  func.func @transform_2(%arg0: i32) -> (i32, i32) {
    %c0_i32 = arith.constant 0 : i32
    %c0_i32_0 = arith.constant 0 : i32
    %c0_i32_1 = arith.constant 0 : i32
    return %c0_i32, %c0_i32_0 : i32, i32
  }
  func.func @transform_3(%arg0: i32) -> (i32, i32) {
    %c0_i32 = arith.constant 0 : i32
    %c0_i32_0 = arith.constant 0 : i32
    %c0_i32_1 = arith.constant 0 : i32
    return %c0_i32, %c0_i32_0 : i32, i32
  }
  func.func @transform_4(%arg0: i32) -> (i32, i32) {
    %c0_i32 = arith.constant 0 : i32
    %c0_i32_0 = arith.constant 0 : i32
    %c0_i32_1 = arith.constant 0 : i32
    return %c0_i32, %c0_i32_0 : i32, i32
  }
  func.func @transform_5(%arg0: i32) -> (i32, i32) {
    %c0_i32 = arith.constant 0 : i32
    %c0_i32_0 = arith.constant 0 : i32
    %c0_i32_1 = arith.constant 0 : i32
    return %c0_i32, %c0_i32_0 : i32, i32
  }
  func.func @transform_6(%arg0: i32) -> (i32, i32) {
    %c0_i32 = arith.constant 0 : i32
    %c0_i32_0 = arith.constant 0 : i32
    %c0_i32_1 = arith.constant 0 : i32
    return %c0_i32, %c0_i32_0 : i32, i32
  }
  func.func @transform_7(%arg0: i32) -> (i32, i32) {
    %c0_i32 = arith.constant 0 : i32
    %c0_i32_0 = arith.constant 0 : i32
    %c0_i32_1 = arith.constant 0 : i32
    return %c0_i32, %c0_i32_0 : i32, i32
  }
  func.func @transform_8(%arg0: i32) -> (i32, i32, i32) {
    %c0_i32 = arith.constant 0 : i32
    %c0_i32_0 = arith.constant 0 : i32
    %c0_i32_1 = arith.constant 0 : i32
    return %arg0, %c0_i32, %c0_i32_0 : i32, i32, i32
  }
}

module attributes {stable_mosaic.version = 11 : i64} {
  func.func @attention_kernel(%arg0: i32, %arg1: memref<8x8x32xf32, #tpu.memory_space<vmem>>, %arg2: memref<8x32xf32, #tpu.memory_space<vmem>>, %arg3: memref<32x32xf32, #tpu.memory_space<vmem>>, %arg4: memref<32x32xf32, #tpu.memory_space<vmem>>, %arg5: memref<1x32xf32, #tpu.memory_space<vmem>>, %arg6: memref<32x32xf32, #tpu.memory_space<vmem>>, %arg7: memref<1x32xf32, #tpu.memory_space<vmem>>, %arg8: memref<1x32xf32, #tpu.memory_space<vmem>>, %arg9: memref<8x1x32xf32, #tpu.memory_space<vmem>>) attributes {dimension_semantics = [#tpu.dimension_semantics<parallel>], iteration_bounds = array<i64: 2>, scalar_prefetch = 0 : i64, scratch_operands = 0 : i64, tpu.core_type = #tpu.core_type<tc>, window_params = [{transform_indices = @transform_0, window_bounds = array<i64: 8, 8, 32>}, {transform_indices = @transform_1, window_bounds = array<i64: 8, 32>}, {pipeline_mode = #tpu.pipeline_mode<synchronous>, transform_indices = @transform_2, window_bounds = array<i64: 32, 32>}, {pipeline_mode = #tpu.pipeline_mode<synchronous>, transform_indices = @transform_3, window_bounds = array<i64: 32, 32>}, {pipeline_mode = #tpu.pipeline_mode<synchronous>, transform_indices = @transform_4, window_bounds = array<i64: 1, 32>}, {pipeline_mode = #tpu.pipeline_mode<synchronous>, transform_indices = @transform_5, window_bounds = array<i64: 32, 32>}, {pipeline_mode = #tpu.pipeline_mode<synchronous>, transform_indices = @transform_6, window_bounds = array<i64: 1, 32>}, {pipeline_mode = #tpu.pipeline_mode<synchronous>, transform_indices = @transform_7, window_bounds = array<i64: 1, 32>}, {transform_indices = @transform_8, window_bounds = array<i64: 8, 1, 32>}]} {
    %c0 = arith.constant 0 : index
    %c0_0 = arith.constant 0 : index
    %c0_1 = arith.constant 0 : index
    %0 = vector.load %arg1[%c0, %c0_0, %c0_1] : memref<8x8x32xf32, #tpu.memory_space<vmem>>, vector<8x8x32xf32>
    %1 = vector.shape_cast %0 : vector<8x8x32xf32> to vector<64x32xf32>
    %c0_2 = arith.constant 0 : index
    %c0_3 = arith.constant 0 : index
    %2 = vector.load %arg2[%c0_2, %c0_3] : memref<8x32xf32, #tpu.memory_space<vmem>>, vector<8x32xf32>
    %c0_4 = arith.constant 0 : index
    %c0_5 = arith.constant 0 : index
    %3 = vector.load %arg4[%c0_4, %c0_5] : memref<32x32xf32, #tpu.memory_space<vmem>>, vector<32x32xf32>
    %cst = arith.constant dense<0.000000e+00> : vector<8x32xf32>
    %4 = tpu.matmul %2, %3, %cst {dimension_numbers = #tpu.dot_dimension_numbers<[1], [0], [0], [1], [0, 0, 1, 1], [], []>} : vector<8x32xf32>, vector<32x32xf32>, vector<8x32xf32> -> vector<8x32xf32>
    %c0_6 = arith.constant 0 : index
    %c0_7 = arith.constant 0 : index
    %5 = vector.load %arg5[%c0_6, %c0_7] : memref<1x32xf32, #tpu.memory_space<vmem>>, vector<1x32xf32>
    %6 = vector.broadcast %5 : vector<1x32xf32> to vector<8x32xf32>
    %7 = arith.addf %4, %6 : vector<8x32xf32>
    %8 = tpu.iota {dimensions = array<i32: 0>} : vector<64x8xi32>
    %9 = tpu.iota {dimensions = array<i32: 1>} : vector<64x8xi32>
    %c8_i32 = arith.constant 8 : i32
    %10 = vector.broadcast %c8_i32 : i32 to vector<64x8xi32>
    %11 = arith.muli %9, %10 : vector<64x8xi32>
    %12 = arith.cmpi sge, %8, %11 : vector<64x8xi32>
    %c1_i32 = arith.constant 1 : i32
    %13 = vector.broadcast %c1_i32 : i32 to vector<64x8xi32>
    %14 = arith.addi %9, %13 : vector<64x8xi32>
    %c8_i32_8 = arith.constant 8 : i32
    %15 = vector.broadcast %c8_i32_8 : i32 to vector<64x8xi32>
    %16 = arith.muli %14, %15 : vector<64x8xi32>
    %17 = arith.cmpi slt, %8, %16 : vector<64x8xi32>
    %18 = arith.andi %12, %17 : vector<64x8xi1>
    %19 = arith.extui %18 : vector<64x8xi1> to vector<64x8xi32>
    %20 = arith.sitofp %19 : vector<64x8xi32> to vector<64x8xf32>
    %cst_9 = arith.constant dense<0.000000e+00> : vector<64x32xf32>
    %21 = tpu.matmul %20, %7, %cst_9 {dimension_numbers = #tpu.dot_dimension_numbers<[1], [0], [0], [1], [0, 0, 1, 1], [], []>} : vector<64x8xf32>, vector<8x32xf32>, vector<64x32xf32> -> vector<64x32xf32>
    %c0_10 = arith.constant 0 : index
    %c0_11 = arith.constant 0 : index
    %22 = vector.load %arg3[%c0_10, %c0_11] : memref<32x32xf32, #tpu.memory_space<vmem>>, vector<32x32xf32>
    %cst_12 = arith.constant dense<0.000000e+00> : vector<64x32xf32>
    %23 = tpu.matmul %1, %22, %cst_12 {dimension_numbers = #tpu.dot_dimension_numbers<[1], [0], [0], [1], [0, 0, 1, 1], [], []>} : vector<64x32xf32>, vector<32x32xf32>, vector<64x32xf32> -> vector<64x32xf32>
    %24 = arith.addf %23, %21 : vector<64x32xf32>
    %cst_13 = arith.constant 0.000000e+00 : f32
    %25 = vector.broadcast %cst_13 : f32 to vector<64x32xf32>
    %26 = arith.maximumf %24, %25 : vector<64x32xf32>
    %c0_14 = arith.constant 0 : index
    %c0_15 = arith.constant 0 : index
    %27 = vector.load %arg6[%c0_14, %c0_15] : memref<32x32xf32, #tpu.memory_space<vmem>>, vector<32x32xf32>
    %cst_16 = arith.constant dense<0.000000e+00> : vector<64x32xf32>
    %28 = tpu.matmul %26, %27, %cst_16 {dimension_numbers = #tpu.dot_dimension_numbers<[1], [0], [0], [1], [0, 0, 1, 1], [], []>} : vector<64x32xf32>, vector<32x32xf32>, vector<64x32xf32> -> vector<64x32xf32>
    %c0_17 = arith.constant 0 : index
    %c0_18 = arith.constant 0 : index
    %29 = vector.load %arg7[%c0_17, %c0_18] : memref<1x32xf32, #tpu.memory_space<vmem>>, vector<1x32xf32>
    %30 = vector.broadcast %29 : vector<1x32xf32> to vector<64x32xf32>
    %31 = arith.addf %28, %30 : vector<64x32xf32>
    %cst_19 = arith.constant 0.000000e+00 : f32
    %32 = vector.broadcast %cst_19 : f32 to vector<64x32xf32>
    %33 = arith.maximumf %31, %32 : vector<64x32xf32>
    %c0_20 = arith.constant 0 : index
    %c0_21 = arith.constant 0 : index
    %34 = vector.load %arg8[%c0_20, %c0_21] : memref<1x32xf32, #tpu.memory_space<vmem>>, vector<1x32xf32>
    %35 = vector.broadcast %34 : vector<1x32xf32> to vector<64x32xf32>
    %36 = arith.mulf %33, %35 : vector<64x32xf32>
    %cst_22 = arith.constant dense<0.000000e+00> : vector<64xf32>
    %37 = vector.multi_reduction <add>, %36, %cst_22 [1] : vector<64x32xf32> to vector<64xf32>
    %38 = vector.shape_cast %37 : vector<64xf32> to vector<64x1xf32>
    %39 = vector.shape_cast %38 : vector<64x1xf32> to vector<8x8x1xf32>
    %cst_23 = arith.constant dense<0xFF800000> : vector<8x1xf32>
    %40 = vector.multi_reduction <maximumf>, %39, %cst_23 [1] : vector<8x8x1xf32> to vector<8x1xf32>
    %41 = vector.shape_cast %40 : vector<8x1xf32> to vector<8x1x1xf32>
    %42 = vector.broadcast %41 : vector<8x1x1xf32> to vector<8x8x1xf32>
    %43 = arith.subf %39, %42 : vector<8x8x1xf32>
    %44 = math.exp %43 : vector<8x8x1xf32>
    %cst_24 = arith.constant dense<0.000000e+00> : vector<8x1xf32>
    %45 = vector.multi_reduction <add>, %44, %cst_24 [1] : vector<8x8x1xf32> to vector<8x1xf32>
    %46 = vector.shape_cast %45 : vector<8x1xf32> to vector<8x1x1xf32>
    %47 = tpu.reciprocal %46 {approx = true} : vector<8x1x1xf32> -> vector<8x1x1xf32>
    %48 = arith.mulf %46, %47 : vector<8x1x1xf32>
    %cst_25 = arith.constant 2.000000e+00 : f32
    %49 = vector.broadcast %cst_25 : f32 to vector<8x1x1xf32>
    %50 = arith.subf %49, %48 : vector<8x1x1xf32>
    %51 = arith.mulf %47, %50 : vector<8x1x1xf32>
    %52 = vector.broadcast %51 : vector<8x1x1xf32> to vector<8x8x1xf32>
    %53 = arith.mulf %44, %52 : vector<8x8x1xf32>
    %54 = vector.broadcast %53 : vector<8x8x1xf32> to vector<8x8x32xf32>
    %55 = arith.mulf %54, %0 : vector<8x8x32xf32>
    %cst_26 = arith.constant dense<0.000000e+00> : vector<8x32xf32>
    %56 = vector.multi_reduction <add>, %55, %cst_26 [1] : vector<8x8x32xf32> to vector<8x32xf32>
    %57 = vector.shape_cast %56 : vector<8x32xf32> to vector<8x1x32xf32>
    %c0_27 = arith.constant 0 : index
    %c0_28 = arith.constant 0 : index
    %c0_29 = arith.constant 0 : index
    %58 = vector.load %arg9[%c0_27, %c0_28, %c0_29] : memref<8x1x32xf32, #tpu.memory_space<vmem>>, vector<8x1x32xf32>
    tpu.vector_store %arg9[%c0_27, %c0_28, %c0_29], %57 {strides = array<i32>} : memref<8x1x32xf32, #tpu.memory_space<vmem>>, vector<8x1x32xf32>,
    return
  }
  func.func @transform_0(%arg0: i32) -> (i32, i32, i32) {
    %c0_i32 = arith.constant 0 : i32
    %c0_i32_0 = arith.constant 0 : i32
    %c0_i32_1 = arith.constant 0 : i32
    return %arg0, %c0_i32, %c0_i32_0 : i32, i32, i32
  }
  func.func @transform_1(%arg0: i32) -> (i32, i32) {
    %c0_i32 = arith.constant 0 : i32
    %c0_i32_0 = arith.constant 0 : i32
    return %arg0, %c0_i32 : i32, i32
  }
  func.func @transform_2(%arg0: i32) -> (i32, i32) {
    %c0_i32 = arith.constant 0 : i32
    %c0_i32_0 = arith.constant 0 : i32
    %c0_i32_1 = arith.constant 0 : i32
    return %c0_i32, %c0_i32_0 : i32, i32
  }
  func.func @transform_3(%arg0: i32) -> (i32, i32) {
    %c0_i32 = arith.constant 0 : i32
    %c0_i32_0 = arith.constant 0 : i32
    %c0_i32_1 = arith.constant 0 : i32
    return %c0_i32, %c0_i32_0 : i32, i32
  }
  func.func @transform_4(%arg0: i32) -> (i32, i32) {
    %c0_i32 = arith.constant 0 : i32
    %c0_i32_0 = arith.constant 0 : i32
    %c0_i32_1 = arith.constant 0 : i32
    return %c0_i32, %c0_i32_0 : i32, i32
  }
  func.func @transform_5(%arg0: i32) -> (i32, i32) {
    %c0_i32 = arith.constant 0 : i32
    %c0_i32_0 = arith.constant 0 : i32
    %c0_i32_1 = arith.constant 0 : i32
    return %c0_i32, %c0_i32_0 : i32, i32
  }
  func.func @transform_6(%arg0: i32) -> (i32, i32) {
    %c0_i32 = arith.constant 0 : i32
    %c0_i32_0 = arith.constant 0 : i32
    %c0_i32_1 = arith.constant 0 : i32
    return %c0_i32, %c0_i32_0 : i32, i32
  }
  func.func @transform_7(%arg0: i32) -> (i32, i32) {
    %c0_i32 = arith.constant 0 : i32
    %c0_i32_0 = arith.constant 0 : i32
    %c0_i32_1 = arith.constant 0 : i32
    return %c0_i32, %c0_i32_0 : i32, i32
  }
  func.func @transform_8(%arg0: i32) -> (i32, i32, i32) {
    %c0_i32 = arith.constant 0 : i32
    %c0_i32_0 = arith.constant 0 : i32
    %c0_i32_1 = arith.constant 0 : i32
    return %arg0, %c0_i32, %c0_i32_0 : i32, i32, i32
  }
}

</mosaic_0001>

<llo_original>
// kernel: tpu_custom_call.1
$region0: #{tpu_custom_call.1}
  #allocation0 [shape = 'u32[]', space=smem, size = 0x4, offset = 0x4, fixed_abs, tag = 'smem constant byte address 0x4 - core index']
  #allocation1 [shape = 'u32[144,128]{1,0:T(1,128)}', space=vmem, size = 0x12000, scoped, tag = 'internal scratch']
  %s0 = inlined_call_operand.hbm [shape: f32[16,8,32], index: 0, kind: input, shape index: {}]
  %s1 = inlined_call_operand.hbm [shape: f32[16,32], index: 1, kind: input, shape index: {}]
  %s2 = inlined_call_operand.hbm [shape: f32[32,32], index: 2, kind: input, shape index: {}]
  %s3 = inlined_call_operand.hbm [shape: f32[32,32], index: 3, kind: input, shape index: {}]
  %s4 = inlined_call_operand.vmem [shape: f32[1,32], index: 4, kind: input, shape index: {}]
  %s5 = inlined_call_operand.hbm [shape: f32[32,32], index: 5, kind: input, shape index: {}]
  %s6 = inlined_call_operand.vmem [shape: f32[1,32], index: 6, kind: input, shape index: {}]
  %s7 = inlined_call_operand.vmem [shape: f32[1,32], index: 7, kind: input, shape index: {}]
  %s8 = inlined_call_operand.hbm [shape: f32[16,1,32], index: 8, kind: output, shape index: {}]
  %s9 = sld [smem:[#allocation0]]
  $region85: #{tpu_custom_call.1} parent=0
    _
  %s11 = ssub.s32 1, %s9
  %s12 = scalar_select 0, %s11, %s9
  $region1: #{tpu_custom_call.1} parent=0
    #allocation2 [shape = 'u8[65536]{0}', space=vmem, size = 0x10000, scoped, tag = 'input window, operand 0']
    #allocation3 [shape = 's32[2]{0}', space=sflag, size = 0x8, scoped, tag = 'scoped memory for tpu_custom_call.1']
    #allocation4 [shape = 's32[2]{0}', space=sflag, size = 0x8, scoped, tag = 'scoped memory for tpu_custom_call.1']
    #allocation5 [shape = 'u8[8192]{0}', space=vmem, size = 0x2000, scoped, tag = 'input window, operand 1']
    #allocation6 [shape = 's32[2]{0}', space=sflag, size = 0x8, scoped, tag = 'scoped memory for tpu_custom_call.1']
    #allocation7 [shape = 'u8[16384]{0}', space=vmem, size = 0x4000, scoped, tag = 'input window, operand 2, single buffered']
    #allocation8 [shape = 'u8[16384]{0}', space=vmem, size = 0x4000, scoped, tag = 'input window, operand 3, single buffered']
    #allocation9 [shape = 's32[1]{0}', space=sflag, size = 0x4, scoped, tag = 'scoped memory for tpu_custom_call.1']
    #allocation10 [shape = 'u8[16384]{0}', space=vmem, size = 0x4000, scoped, tag = 'input window, operand 5, single buffered']
    #allocation11 [shape = 'u8[8192]{0}', space=vmem, size = 0x2000, scoped, tag = 'output window, operand 0']
    %13 = vsyncpa [#allocation3], 0
    %s14 = scalar_lea.sflag [#allocation3], 1
    %15 = vsyncpa %s14, 0
    %16 = vsyncpa [#allocation6], 0
    %s17 = scalar_lea.sflag [#allocation6], 1
    %18 = vsyncpa %s17, 0
    %19 = vsyncpa [#allocation9], 0
    %20 = vsyncpa [#allocation4], 0
    %s21 = scalar_lea.sflag [#allocation4], 1
    %22 = vsyncpa %s21, 0
    loop: start=0, step=1, limit=4
    $region2: #{tpu_custom_call.1} parent=1 // loop_pre_header
      _
    $region3: #{tpu_custom_call.1} parent=1 // loop_header
      %s24 = sphi 0, %s28
      %p25 = scmp.ge.s32.totalorder %s24, 4
      %s34 = sphi 0, %s36
      %s37 = sphi 0, %s34
      %s38 = sphi 0, %s37
      %s54 = sphi 0, %s38
      %s60 = sphi 0, %s62
      %s63 = sphi 0, %s60
      %s64 = sphi 0, %s63
      %s80 = sphi 0, %s64
      %s84 = sphi 0, %s84
      %s86 = sphi 0, %s84
      %s87 = sphi 0, %s86
      %s101 = sphi 0, %s87
      %s105 = sphi 0, %s105
      %s107 = sphi 0, %s105
      %s108 = sphi 0, %s107
      %s122 = sphi 0, %s108
      %s126 = sphi 0, %s126
      %s128 = sphi 0, %s126
      %s129 = sphi 0, %s128
      %s143 = sphi 0, %s129
      %s147 = sphi 0, %s147
      %s149 = sphi 0, %s147
      %s150 = sphi 0, %s149
      %s164 = sphi 0, %s150
      %s168 = sphi 0, %s168
      %s170 = sphi 0, %s168
      %s171 = sphi 0, %s170
      %s185 = sphi 0, %s171
      %s189 = sphi 0, %s189
      %s191 = sphi 0, %s189
      %s192 = sphi 0, %s191
      %s206 = sphi 0, %s192
      %s212 = sphi 0, %s214
      %s215 = sphi 0, %s212
      %s216 = sphi 0, %s215
      %s232 = sphi 0, %s216
    $region4: #{tpu_custom_call.1} parent=1 // loop_header_branch
      %27 = sbr.rel (%p25) target = $region8
    $region5: #{tpu_custom_call.1} parent=1 // loop_body
      %s29 = ssub.s32 %s24, 1
      %s30 = ssub.s32 %s24, 2
      %s31 = sadd.s32 %s24, 1
      %s32 = ssub.s32 %s24, %s31
      %p33 = scmp.eq.s32.totalorder %s32, 0
      %s35 = sadd.s32 %s34, 1
      %s36 = scalar_select %p33, %s34, %s35
      %p39 = pneg %p33
      %p40 = scmp.eq.s32.totalorder %s24, 1
      %p41 = por %p39, %p40
      %p42 = scmp.ne.s32.totalorder %s34, %s37
      %p43 = scmp.eq.s32.totalorder %s24, 0
      %p44 = por %p42, %p43
      %p45 = scmp.ne.s32.totalorder %s34, %s37
      %p46 = scmp.eq.s32.totalorder %s29, 1
      %p47 = por %p45, %p46
      %p48 = scmp.ne.s32.totalorder %s37, %s38
      %p49 = scmp.eq.s32.totalorder %s29, 0
      %p50 = por %p48, %p49
      %p51 = scmp.ne.s32.totalorder %s37, %s38
      %p52 = scmp.eq.s32.totalorder %s30, 1
      %p53 = por %p51, %p52
      %p55 = scmp.ne.s32.totalorder %s38, %s54
      %p56 = scmp.eq.s32.totalorder %s30, 0
      %p57 = por %p55, %p56
      %s58 = ssub.s32 %s24, %s31
      %p59 = scmp.eq.s32.totalorder %s58, 0
      %s61 = sadd.s32 %s60, 1
      %s62 = scalar_select %p59, %s60, %s61
      %p65 = pneg %p59
      %p66 = scmp.eq.s32.totalorder %s24, 1
      %p67 = por %p65, %p66
      %p68 = scmp.ne.s32.totalorder %s60, %s63
      %p69 = scmp.eq.s32.totalorder %s24, 0
      %p70 = por %p68, %p69
      %p71 = scmp.ne.s32.totalorder %s60, %s63
      %p72 = scmp.eq.s32.totalorder %s29, 1
      %p73 = por %p71, %p72
      %p74 = scmp.ne.s32.totalorder %s63, %s64
      %p75 = scmp.eq.s32.totalorder %s29, 0
      %p76 = por %p74, %p75
      %p77 = scmp.ne.s32.totalorder %s63, %s64
      %p78 = scmp.eq.s32.totalorder %s30, 1
      %p79 = por %p77, %p78
      %p81 = scmp.ne.s32.totalorder %s64, %s80
      %p82 = scmp.eq.s32.totalorder %s30, 0
      %p83 = por %p81, %p82
      %s85 = sadd.s32 %s84, 1
      %p88 = scmp.eq.s32.totalorder %s24, 1
      %p89 = scmp.ne.s32.totalorder %s84, %s86
      %p90 = scmp.eq.s32.totalorder %s24, 0
      %p91 = por %p89, %p90
      %p92 = scmp.ne.s32.totalorder %s84, %s86
      %p93 = scmp.eq.s32.totalorder %s29, 1
      %p94 = por %p92, %p93
      %p95 = scmp.ne.s32.totalorder %s86, %s87
      %p96 = scmp.eq.s32.totalorder %s29, 0
      %p97 = por %p95, %p96
      %p98 = scmp.ne.s32.totalorder %s86, %s87
      %p99 = scmp.eq.s32.totalorder %s30, 1
      %p100 = por %p98, %p99
      %p102 = scmp.ne.s32.totalorder %s87, %s101
      %p103 = scmp.eq.s32.totalorder %s30, 0
      %p104 = por %p102, %p103
      %s106 = sadd.s32 %s105, 1
      %p109 = scmp.eq.s32.totalorder %s24, 1
      %p110 = scmp.ne.s32.totalorder %s105, %s107
      %p111 = scmp.eq.s32.totalorder %s24, 0
      %p112 = por %p110, %p111
      %p113 = scmp.ne.s32.totalorder %s105, %s107
      %p114 = scmp.eq.s32.totalorder %s29, 1
      %p115 = por %p113, %p114
      %p116 = scmp.ne.s32.totalorder %s107, %s108
      %p117 = scmp.eq.s32.totalorder %s29, 0
      %p118 = por %p116, %p117
      %p119 = scmp.ne.s32.totalorder %s107, %s108
      %p120 = scmp.eq.s32.totalorder %s30, 1
      %p121 = por %p119, %p120
      %p123 = scmp.ne.s32.totalorder %s108, %s122
      %p124 = scmp.eq.s32.totalorder %s30, 0
      %p125 = por %p123, %p124
      %s127 = sadd.s32 %s126, 1
      %p130 = scmp.eq.s32.totalorder %s24, 1
      %p131 = scmp.ne.s32.totalorder %s126, %s128
      %p132 = scmp.eq.s32.totalorder %s24, 0
      %p133 = por %p131, %p132
      %p134 = scmp.ne.s32.totalorder %s126, %s128
      %p135 = scmp.eq.s32.totalorder %s29, 1
      %p136 = por %p134, %p135
      %p137 = scmp.ne.s32.totalorder %s128, %s129
      %p138 = scmp.eq.s32.totalorder %s29, 0
      %p139 = por %p137, %p138
      %p140 = scmp.ne.s32.totalorder %s128, %s129
      %p141 = scmp.eq.s32.totalorder %s30, 1
      %p142 = por %p140, %p141
      %p144 = scmp.ne.s32.totalorder %s129, %s143
      %p145 = scmp.eq.s32.totalorder %s30, 0
      %p146 = por %p144, %p145
      %s148 = sadd.s32 %s147, 1
      %p151 = scmp.eq.s32.totalorder %s24, 1
      %p152 = scmp.ne.s32.totalorder %s147, %s149
      %p153 = scmp.eq.s32.totalorder %s24, 0
      %p154 = por %p152, %p153
      %p155 = scmp.ne.s32.totalorder %s147, %s149
      %p156 = scmp.eq.s32.totalorder %s29, 1
      %p157 = por %p155, %p156
      %p158 = scmp.ne.s32.totalorder %s149, %s150
      %p159 = scmp.eq.s32.totalorder %s29, 0
      %p160 = por %p158, %p159
      %p161 = scmp.ne.s32.totalorder %s149, %s150
      %p162 = scmp.eq.s32.totalorder %s30, 1
      %p163 = por %p161, %p162
      %p165 = scmp.ne.s32.totalorder %s150, %s164
      %p166 = scmp.eq.s32.totalorder %s30, 0
      %p167 = por %p165, %p166
      %s169 = sadd.s32 %s168, 1
      %p172 = scmp.eq.s32.totalorder %s24, 1
      %p173 = scmp.ne.s32.totalorder %s168, %s170
      %p174 = scmp.eq.s32.totalorder %s24, 0
      %p175 = por %p173, %p174
      %p176 = scmp.ne.s32.totalorder %s168, %s170
      %p177 = scmp.eq.s32.totalorder %s29, 1
      %p178 = por %p176, %p177
      %p179 = scmp.ne.s32.totalorder %s170, %s171
      %p180 = scmp.eq.s32.totalorder %s29, 0
      %p181 = por %p179, %p180
      %p182 = scmp.ne.s32.totalorder %s170, %s171
      %p183 = scmp.eq.s32.totalorder %s30, 1
      %p184 = por %p182, %p183
      %p186 = scmp.ne.s32.totalorder %s171, %s185
      %p187 = scmp.eq.s32.totalorder %s30, 0
      %p188 = por %p186, %p187
      %s190 = sadd.s32 %s189, 1
      %p193 = scmp.eq.s32.totalorder %s24, 1
      %p194 = scmp.ne.s32.totalorder %s189, %s191
      %p195 = scmp.eq.s32.totalorder %s24, 0
      %p196 = por %p194, %p195
      %p197 = scmp.ne.s32.totalorder %s189, %s191
      %p198 = scmp.eq.s32.totalorder %s29, 1
      %p199 = por %p197, %p198
      %p200 = scmp.ne.s32.totalorder %s191, %s192
      %p201 = scmp.eq.s32.totalorder %s29, 0
      %p202 = por %p200, %p201
      %p203 = scmp.ne.s32.totalorder %s191, %s192
      %p204 = scmp.eq.s32.totalorder %s30, 1
      %p205 = por %p203, %p204
      %p207 = scmp.ne.s32.totalorder %s192, %s206
      %p208 = scmp.eq.s32.totalorder %s30, 0
      %p209 = por %p207, %p208
      %s210 = ssub.s32 %s24, %s31
      %p211 = scmp.eq.s32.totalorder %s210, 0
      %s213 = sadd.s32 %s212, 1
      %s214 = scalar_select %p211, %s212, %s213
      %p217 = pneg %p211
      %p218 = scmp.eq.s32.totalorder %s24, 1
      %p219 = por %p217, %p218
      %p220 = scmp.ne.s32.totalorder %s212, %s215
      %p221 = scmp.eq.s32.totalorder %s24, 0
      %p222 = por %p220, %p221
      %p223 = scmp.ne.s32.totalorder %s212, %s215
      %p224 = scmp.eq.s32.totalorder %s29, 1
      %p225 = por %p223, %p224
      %p226 = scmp.ne.s32.totalorder %s215, %s216
      %p227 = scmp.eq.s32.totalorder %s29, 0
      %p228 = por %p226, %p227
      %p229 = scmp.ne.s32.totalorder %s215, %s216
      %p230 = scmp.eq.s32.totalorder %s30, 1
      %p231 = por %p229, %p230
      %p233 = scmp.ne.s32.totalorder %s216, %s232
      %p234 = scmp.eq.s32.totalorder %s30, 0
      %p235 = por %p233, %p234
      %p236 = scmp.le.s32.totalorder 1, %s24
      %p237 = scmp.lt.s32.totalorder %s24, 3
      %p238 = pnand %p236, %p237
      %p239 = pneg %p238
      // Predicated region
      $region9: #{tpu_custom_call.1} parent=5 // pred_check
        _
      $region10: #{tpu_custom_call.1} parent=5 // pred_check_branch
        %241 = sbr.rel (%p238) target = $region12
      $region11: #{tpu_custom_call.1} parent=5 // pred_region
        %s242 = ssub.s32 %s24, 1
        // Predicated region
        $region13: #{tpu_custom_call.1} parent=11 // pred_check
          %p243 = pneg %p97
        $region14: #{tpu_custom_call.1} parent=11 // pred_check_branch
          %245 = sbr.rel (%p243) target = $region16
        $region15: #{tpu_custom_call.1} parent=11 // pred_region
          %s247 = ssub.s32 512, 512
          %248 = vsyncadd [#allocation6], %s247
          %s249 = sshll.u32 [#allocation7], 4
          %s250 = int_to_ptr.vmem [resolvable:$true] %s249
          %255 = dma.hbm_to_vmem [thread:$0]  %s2, 512, %s250, [#allocation6], 128, 128, 8
        $region16: #{tpu_custom_call.1} parent=11 // pred_fallthru
          _
        // Predicated region
        $region17: #{tpu_custom_call.1} parent=11 // pred_check
          %p256 = pneg %p118
        $region18: #{tpu_custom_call.1} parent=11 // pred_check_branch
          %258 = sbr.rel (%p256) target = $region20
        $region19: #{tpu_custom_call.1} parent=11 // pred_region
          %s260 = ssub.s32 512, 512
          %261 = vsyncadd [#allocation9], %s260
          %s262 = sshll.u32 [#allocation8], 4
          %s263 = int_to_ptr.vmem [resolvable:$true] %s262
          %268 = dma.hbm_to_vmem [thread:$0]  %s3, 512, %s263, [#allocation9], 128, 128, 8
        $region20: #{tpu_custom_call.1} parent=11 // pred_fallthru
          _
        // Predicated region
        $region21: #{tpu_custom_call.1} parent=11 // pred_check
          %p269 = pneg %p139
        $region22: #{tpu_custom_call.1} parent=11 // pred_check_branch
          %271 = sbr.rel (%p269) target = $region24
        $region23: #{tpu_custom_call.1} parent=11 // pred_region
          _
        $region24: #{tpu_custom_call.1} parent=11 // pred_fallthru
          _
        // Predicated region
        $region25: #{tpu_custom_call.1} parent=11 // pred_check
          %p272 = pneg %p160
        $region26: #{tpu_custom_call.1} parent=11 // pred_check_branch
          %274 = sbr.rel (%p272) target = $region28
        $region27: #{tpu_custom_call.1} parent=11 // pred_region
          %s276 = ssub.s32 512, 512
          %277 = vsyncadd [#allocation9], %s276
          %s278 = sshll.u32 [#allocation10], 4
          %s279 = int_to_ptr.vmem [resolvable:$true] %s278
          %284 = dma.hbm_to_vmem [thread:$0]  %s5, 512, %s279, [#allocation9], 128, 128, 8
        $region28: #{tpu_custom_call.1} parent=11 // pred_fallthru
          _
        // Predicated region
        $region29: #{tpu_custom_call.1} parent=11 // pred_check
          %p285 = pneg %p181
        $region30: #{tpu_custom_call.1} parent=11 // pred_check_branch
          %287 = sbr.rel (%p285) target = $region32
        $region31: #{tpu_custom_call.1} parent=11 // pred_region
          _
        $region32: #{tpu_custom_call.1} parent=11 // pred_fallthru
          _
        // Predicated region
        $region33: #{tpu_custom_call.1} parent=11 // pred_check
          %p288 = pneg %p202
        $region34: #{tpu_custom_call.1} parent=11 // pred_check_branch
          %290 = sbr.rel (%p288) target = $region36
        $region35: #{tpu_custom_call.1} parent=11 // pred_region
          _
        $region36: #{tpu_custom_call.1} parent=11 // pred_fallthru
          _
      $region12: #{tpu_custom_call.1} parent=5 // pred_fallthru
        _
      %p291 = scmp.lt.s32.totalorder %s24, 2
      // Predicated region
      $region37: #{tpu_custom_call.1} parent=5 // pred_check
        %p292 = pneg %p291
      $region38: #{tpu_custom_call.1} parent=5 // pred_check_branch
        %294 = sbr.rel (%p292) target = $region40
      $region39: #{tpu_custom_call.1} parent=5 // pred_region
        // Predicated region
        $region41: #{tpu_custom_call.1} parent=39 // pred_check
          %p295 = pneg %p44
        $region42: #{tpu_custom_call.1} parent=39 // pred_check_branch
          %297 = sbr.rel (%p295) target = $region44
        $region43: #{tpu_custom_call.1} parent=39 // pred_region
          %s298 = sand.u32 %s34, 1
          %s299 = scalar_lea.sflag [#allocation3], %s298
          %s300 = sand.u32 %s34, 1
          %s301 = smul.addr %s300, 64
          %s302 = scalar_lea.vmem [#allocation2], %s301
          %s303 = smul.u32 8, %s24
          %s305 = ssub.s32 1024, 1024
          %306 = vsyncadd %s299, %s305
          %s307 = smul.addr %s303, 128
          %s308 = scalar_lea.hbm %s0, %s307
          %s309 = sshll.u32 %s302, 4
          %s310 = int_to_ptr.vmem [resolvable:$true] %s309
          %315 = dma.hbm_to_vmem [thread:$0]  %s308, 1024, %s310, %s299, 128, 128, 8
        $region44: #{tpu_custom_call.1} parent=39 // pred_fallthru
          _
        // Predicated region
        $region45: #{tpu_custom_call.1} parent=39 // pred_check
          %p316 = pneg %p70
        $region46: #{tpu_custom_call.1} parent=39 // pred_check_branch
          %318 = sbr.rel (%p316) target = $region48
        $region47: #{tpu_custom_call.1} parent=39 // pred_region
          %s319 = sand.u32 %s24, 1
          %s320 = scalar_lea.sflag [#allocation6], %s319
          %s321 = sand.u32 %s60, 1
          %s322 = smul.addr %s321, 8
          %s323 = scalar_lea.vmem [#allocation5], %s322
          %s325 = ssub.s32 128, 128
          %326 = vsyncadd %s320, %s325
          %s327 = smul.addr %s24, 128
          %s328 = scalar_lea.hbm %s1, %s327
          %s330 = sshll.u32 %s323, 4
          %s331 = int_to_ptr.vmem [resolvable:$true] %s330
          %333 = dma.hbm_to_vmem [thread:$0]  %s328, 128, %s331, %s320
        $region48: #{tpu_custom_call.1} parent=39 // pred_fallthru
          _
      $region40: #{tpu_custom_call.1} parent=5 // pred_fallthru
        _
      %p334 = scmp.le.s32.totalorder 1, %s24
      %p335 = scmp.lt.s32.totalorder %s24, 3
      %p336 = pnand %p334, %p335
      %p337 = pneg %p336
      // Predicated region
      $region49: #{tpu_custom_call.1} parent=5 // pred_check
        _
      $region50: #{tpu_custom_call.1} parent=5 // pred_check_branch
        %339 = sbr.rel (%p336) target = $region52
      $region51: #{tpu_custom_call.1} parent=5 // pred_region
        %s340 = ssub.s32 %s24, 1
        %s341 = sand.u32 %s37, 1
        %s342 = scalar_lea.sflag [#allocation3], %s341
        %s343 = sand.u32 %s37, 1
        %s344 = smul.addr %s343, 64
        %s345 = scalar_lea.vmem [#allocation2], %s344
        // Predicated region
        $region53: #{tpu_custom_call.1} parent=51 // pred_check
          %p346 = pneg %p50
        $region54: #{tpu_custom_call.1} parent=51 // pred_check_branch
          %348 = sbr.rel (%p346) target = $region56
        $region55: #{tpu_custom_call.1} parent=51 // pred_region
          %349 = dma.done %s342, 1024
        $region56: #{tpu_custom_call.1} parent=51 // pred_fallthru
          _
        %s350 = sand.u32 %s29, 1
        %s351 = scalar_lea.sflag [#allocation6], %s350
        %s352 = sand.u32 %s63, 1
        %s353 = smul.addr %s352, 8
        %s354 = scalar_lea.vmem [#allocation5], %s353
        // Predicated region
        $region57: #{tpu_custom_call.1} parent=51 // pred_check
          %p355 = pneg %p76
        $region58: #{tpu_custom_call.1} parent=51 // pred_check_branch
          %357 = sbr.rel (%p355) target = $region60
        $region59: #{tpu_custom_call.1} parent=51 // pred_region
          %358 = dma.done %s351, 128
        $region60: #{tpu_custom_call.1} parent=51 // pred_fallthru
          _
        // Predicated region
        $region61: #{tpu_custom_call.1} parent=51 // pred_check
          %p359 = pneg %p97
        $region62: #{tpu_custom_call.1} parent=51 // pred_check_branch
          %361 = sbr.rel (%p359) target = $region64
        $region63: #{tpu_custom_call.1} parent=51 // pred_region
          %362 = dma.done [#allocation6], 512
        $region64: #{tpu_custom_call.1} parent=51 // pred_fallthru
          _
        // Predicated region
        $region65: #{tpu_custom_call.1} parent=51 // pred_check
          %p363 = pneg %p118
        $region66: #{tpu_custom_call.1} parent=51 // pred_check_branch
          %365 = sbr.rel (%p363) target = $region68
        $region67: #{tpu_custom_call.1} parent=51 // pred_region
          %366 = dma.done [#allocation9], 512
        $region68: #{tpu_custom_call.1} parent=51 // pred_fallthru
          _
        // Predicated region
        $region69: #{tpu_custom_call.1} parent=51 // pred_check
          %p367 = pneg %p160
        $region70: #{tpu_custom_call.1} parent=51 // pred_check_branch
          %369 = sbr.rel (%p367) target = $region72
        $region71: #{tpu_custom_call.1} parent=51 // pred_region
          %370 = dma.done [#allocation9], 512
        $region72: #{tpu_custom_call.1} parent=51 // pred_fallthru
          _
        %s371 = sand.u32 %s37, 1
        %s372 = scalar_lea.sflag [#allocation3], %s371
        %s373 = sand.u32 %s37, 1
        %s374 = smul.addr %s373, 64
        %s375 = scalar_lea.vmem [#allocation2], %s374
        %p376 = pneg %p50
        %p377 = pneg %p47
        %s378 = sand.u32 %s29, 1
        %s379 = scalar_lea.sflag [#allocation6], %s378
        %s380 = sand.u32 %s63, 1
        %s381 = smul.addr %s380, 8
        %s382 = scalar_lea.vmem [#allocation5], %s381
        %p383 = pneg %p76
        %p384 = pneg %p73
        %p385 = pneg %p97
        %p386 = pneg %p94
        %p387 = pneg %p118
        %p388 = pneg %p115
        %p389 = pneg %p139
        %p390 = pneg %p136
        %p391 = pneg %p160
        %p392 = pneg %p157
        %p393 = pneg %p181
        %p394 = pneg %p178
        %p395 = pneg %p202
        %p396 = pneg %p199
        %p397 = pneg %p228
        %p398 = pneg %p225
        %s399 = sand.u32 %s215, 1
        %s400 = scalar_lea.sflag [#allocation4], %s399
        %s401 = sand.u32 %s215, 1
        %s402 = smul.addr %s401, 8
        %s403 = scalar_lea.vmem [#allocation11], %s402
        %s404 = smul.u32 8, %s29
        %s405 = smul.u32 8, %s29
        %v406 = vld [vmem:[%s345] sm:$0xff]
        %v407 = vld [vmem:[%s345 + $0x8] sm:$0xff]
        %v408 = vld [vmem:[%s345 + $0x10] sm:$0xff]
        %v409 = vld [vmem:[%s345 + $0x18] sm:$0xff]
        %v410 = vld [vmem:[%s345 + $0x20] sm:$0xff]
        %v411 = vld [vmem:[%s345 + $0x28] sm:$0xff]
        %v412 = vld [vmem:[%s345 + $0x30] sm:$0xff]
        %v413 = vld [vmem:[%s345 + $0x38] sm:$0xff]
        %v414 = vld [vmem:[%s354] sm:$0xff]
        %v415 = vld [vmem:[#allocation8] sm:$0xff]
        %v416 = vld [vmem:[#allocation8 + $0x8] sm:$0xff]
        %v417 = vld [vmem:[#allocation8 + $0x10] sm:$0xff]
        %v418 = vld [vmem:[#allocation8 + $0x18] sm:$0xff]
        %v419 = vld [vmem:[%s4] sm:$0x1]
        %v421 = vlaneseq
        %v422 = vshrl.u32 %v421, 7
        %v423 = vsub.s32 0, %v422
        %v424 = vrot.slane %v419, %v423
        %vm426 = vcmask 261120
        %v428 = vsel %vm426, %v414, 0
        %430 = vmatprep.subr.mxu0 0.0
        %431 = vmatpush1.msra.mxu0 %v415
        %432 = vmatprep.subr.mxu0 0.0
        %433 = vmatpush1.msra.mxu0 %v416
        %434 = vmatprep.subr.mxu0 0.0
        %435 = vmatpush1.msra.mxu0 %v417
        %436 = vmatprep.subr.mxu0 0.0
        %437 = vmatpush1.msra.mxu0 %v418
        %438 = vmatprep.subr.mxu0 0.0
        %439 = vmatpush1.msra.mxu0 0.0
        %440 = vmatprep.subr.mxu0 0.0
        %441 = vmatpush1.msra.mxu0 0.0
        %442 = vmatprep.subr.mxu0 0.0
        %443 = vmatpush1.msra.mxu0 0.0
        %444 = vmatprep.subr.mxu0 0.0
        %445 = vmatpush1.msra.mxu0 0.0
        %446 = vmatprep.subr.mxu0 0.0
        %447 = vmatpush1.msra.mxu0 0.0
        %448 = vmatprep.subr.mxu0 0.0
        %449 = vmatpush1.msra.mxu0 0.0
        %450 = vmatprep.subr.mxu0 0.0
        %451 = vmatpush1.msra.mxu0 0.0
        %452 = vmatprep.subr.mxu0 0.0
        %453 = vmatpush1.msra.mxu0 0.0
        %454 = vmatprep.subr.mxu0 0.0
        %455 = vmatpush1.msra.mxu0 0.0
        %456 = vmatprep.subr.mxu0 0.0
        %457 = vmatpush1.msra.mxu0 0.0
        %458 = vmatprep.subr.mxu0 0.0
        %459 = vmatpush1.msra.mxu0 0.0
        %460 = vmatprep.subr.mxu0 0.0
        %461 = vmatpush1.msra.mxu0 0.0
        %462 = vmatprep.subr.mxu0 0.0
        %463 = vmatpush1.msra.mxu0 0.0
        %464 = vmatprep.subr.mxu0 0.0
        %465 = vmatpush1.msra.mxu0 0.0
        %466 = vmatprep.subr.mxu0 0.0
        %467 = vmatpush1.msra.mxu0 0.0
        %468 = vmatprep.subr.mxu0 0.0
        %469 = vmatpush1.msra.mxu0 0.0
        %470 = vmatprep.subr.mxu0 0.0
        %471 = vmatpush1.msra.mxu0 0.0
        %472 = vmatprep.subr.mxu0 0.0
        %473 = vmatpush1.msra.mxu0 0.0
        %474 = vmatprep.subr.mxu0 0.0
        %475 = vmatpush1.msra.mxu0 0.0
        %476 = vmatprep.subr.mxu0 0.0
        %477 = vmatpush1.msra.mxu0 0.0
        %478 = vmatprep.subr.mxu0 0.0
        %479 = vmatpush1.msra.mxu0 0.0
        %480 = vmatprep.subr.mxu0 0.0
        %481 = vmatpush1.msra.mxu0 0.0
        %482 = vmatprep.subr.mxu0 0.0
        %483 = vmatpush1.msra.mxu0 0.0
        %484 = vmatprep.subr.mxu0 0.0
        %485 = vmatpush1.msra.mxu0 0.0
        %486 = vmatprep.subr.mxu0 0.0
        %487 = vmatpush1.msra.mxu0 0.0
        %488 = vmatprep.subr.mxu0 0.0
        %489 = vmatpush1.msra.mxu0 0.0
        %490 = vmatprep.subr.mxu0 0.0
        %491 = vmatpush1.msra.mxu0 0.0
        %492 = vmatprep.subr.mxu0 0.0
        %493 = vmatpush1.msra.mxu0 0.0
        %494 = vmatprep.mubr.f32.mxu0 0.0
        %495 = vmatmul.mubr.f32.gmra.mrb[0].mxu0 %v428
        %v496 = vpop.f32.mrb[0].mxu0
        %v497 = vadd.f32 %v424, %v496
        %v498 = vpop.f32.mrb[0].mxu0
        %499 = vdwg.mxu0
        %v500 = vlaneseq
        %v501 = vshrl.u32 %v500, 7
        %v502 = vadd.s32 %v501, 8
        %v503 = vadd.s32 %v501, 16
        %v504 = vadd.s32 %v501, 24
        %v505 = vadd.s32 %v501, 32
        %v506 = vadd.s32 %v501, 40
        %v507 = vadd.s32 %v501, 48
        %v508 = vadd.s32 %v501, 56
        %v509 = vlaneseq
        %v510 = vand.u32 %v509, 127
        %v511 = vmul.u32 %v510, 8
        %vm512 = vcmp.ge.s32.totalorder %v501, %v511
        %vm513 = vcmp.ge.s32.totalorder %v502, %v511
        %vm514 = vcmp.ge.s32.totalorder %v503, %v511
        %vm515 = vcmp.ge.s32.totalorder %v504, %v511
        %vm516 = vcmp.ge.s32.totalorder %v505, %v511
        %vm517 = vcmp.ge.s32.totalorder %v506, %v511
        %vm518 = vcmp.ge.s32.totalorder %v507, %v511
        %vm519 = vcmp.ge.s32.totalorder %v508, %v511
        %v520 = vadd.s32 %v510, 1
        %v521 = vmul.u32 %v520, 8
        %vm522 = vcmp.lt.s32.totalorder %v501, %v521
        %vm523 = vcmp.lt.s32.totalorder %v502, %v521
        %vm524 = vcmp.lt.s32.totalorder %v503, %v521
        %vm525 = vcmp.lt.s32.totalorder %v504, %v521
        %vm526 = vcmp.lt.s32.totalorder %v505, %v521
        %vm527 = vcmp.lt.s32.totalorder %v506, %v521
        %vm528 = vcmp.lt.s32.totalorder %v507, %v521
        %vm529 = vcmp.lt.s32.totalorder %v508, %v521
        %vm530 = vmand %vm512, %vm522
        %vm531 = vmand %vm513, %vm523
        %vm532 = vmand %vm514, %vm524
        %vm533 = vmand %vm515, %vm525
        %vm534 = vmand %vm516, %vm526
        %vm535 = vmand %vm517, %vm527
        %vm536 = vmand %vm518, %vm528
        %vm537 = vmand %vm519, %vm529
        %v538 = vsel %vm530, 1, 0
        %v539 = vsel %vm531, 1, 0
        %v540 = vsel %vm532, 1, 0
        %v541 = vsel %vm533, 1, 0
        %v542 = vsel %vm534, 1, 0
        %v543 = vsel %vm535, 1, 0
        %v544 = vsel %vm536, 1, 0
        %v545 = vsel %vm537, 1, 0
        %v546 = vcvt.s32.f32 %v538
        %v547 = vcvt.s32.f32 %v539
        %v548 = vcvt.s32.f32 %v540
        %v549 = vcvt.s32.f32 %v541
        %v550 = vcvt.s32.f32 %v542
        %v551 = vcvt.s32.f32 %v543
        %v552 = vcvt.s32.f32 %v544
        %v553 = vcvt.s32.f32 %v545
        %vm554 = vcmask 64512
        %v556 = vsel %vm554, %v546, 0
        %v559 = vsel %vm554, %v547, 0
        %v562 = vsel %vm554, %v548, 0
        %v565 = vsel %vm554, %v549, 0
        %v568 = vsel %vm554, %v550, 0
        %v571 = vsel %vm554, %v551, 0
        %v574 = vsel %vm554, %v552, 0
        %v577 = vsel %vm554, %v553, 0
        %579 = vmatprep.subr.mxu0 0.0
        %580 = vmatpush1.msra.mxu0 %v497
        %581 = vmatprep.subr.mxu0 0.0
        %582 = vmatpush1.msra.mxu0 0.0
        %583 = vmatprep.subr.mxu0 0.0
        %584 = vmatpush1.msra.mxu0 0.0
        %585 = vmatprep.subr.mxu0 0.0
        %586 = vmatpush1.msra.mxu0 0.0
        %587 = vmatprep.subr.mxu0 0.0
        %588 = vmatpush1.msra.mxu0 0.0
        %589 = vmatprep.subr.mxu0 0.0
        %590 = vmatpush1.msra.mxu0 0.0
        %591 = vmatprep.subr.mxu0 0.0
        %592 = vmatpush1.msra.mxu0 0.0
        %593 = vmatprep.subr.mxu0 0.0
        %594 = vmatpush1.msra.mxu0 0.0
        %595 = vmatprep.subr.mxu0 0.0
        %596 = vmatpush1.msra.mxu0 0.0
        %597 = vmatprep.subr.mxu0 0.0
        %598 = vmatpush1.msra.mxu0 0.0
        %599 = vmatprep.subr.mxu0 0.0
        %600 = vmatpush1.msra.mxu0 0.0
        %601 = vmatprep.subr.mxu0 0.0
        %602 = vmatpush1.msra.mxu0 0.0
        %603 = vmatprep.subr.mxu0 0.0
        %604 = vmatpush1.msra.mxu0 0.0
        %605 = vmatprep.subr.mxu0 0.0
        %606 = vmatpush1.msra.mxu0 0.0
        %607 = vmatprep.subr.mxu0 0.0
        %608 = vmatpush1.msra.mxu0 0.0
        %609 = vmatprep.subr.mxu0 0.0
        %610 = vmatpush1.msra.mxu0 0.0
        %611 = vmatprep.subr.mxu0 0.0
        %612 = vmatpush1.msra.mxu0 0.0
        %613 = vmatprep.subr.mxu0 0.0
        %614 = vmatpush1.msra.mxu0 0.0
        %615 = vmatprep.subr.mxu0 0.0
        %616 = vmatpush1.msra.mxu0 0.0
        %617 = vmatprep.subr.mxu0 0.0
        %618 = vmatpush1.msra.mxu0 0.0
        %619 = vmatprep.subr.mxu0 0.0
        %620 = vmatpush1.msra.mxu0 0.0
        %621 = vmatprep.subr.mxu0 0.0
        %622 = vmatpush1.msra.mxu0 0.0
        %623 = vmatprep.subr.mxu0 0.0
        %624 = vmatpush1.msra.mxu0 0.0
        %625 = vmatprep.subr.mxu0 0.0
        %626 = vmatpush1.msra.mxu0 0.0
        %627 = vmatprep.subr.mxu0 0.0
        %628 = vmatpush1.msra.mxu0 0.0
        %629 = vmatprep.subr.mxu0 0.0
        %630 = vmatpush1.msra.mxu0 0.0
        %631 = vmatprep.subr.mxu0 0.0
        %632 = vmatpush1.msra.mxu0 0.0
        %633 = vmatprep.subr.mxu0 0.0
        %634 = vmatpush1.msra.mxu0 0.0
        %635 = vmatprep.subr.mxu0 0.0
        %636 = vmatpush1.msra.mxu0 0.0
        %637 = vmatprep.subr.mxu0 0.0
        %638 = vmatpush1.msra.mxu0 0.0
        %639 = vmatprep.subr.mxu0 0.0
        %640 = vmatpush1.msra.mxu0 0.0
        %641 = vmatprep.subr.mxu0 0.0
        %642 = vmatpush1.msra.mxu0 0.0
        %643 = vmatprep.mubr.f32.mxu0 0.0
        %644 = vmatmul.mubr.f32.gmra.mrb[0].mxu0 %v556
        %v645 = vpop.f32.mrb[0].mxu0
        %v646 = vadd.f32 0.0, %v645
        %v647 = vpop.f32.mrb[0].mxu0
        %648 = vmatprep.mubr.f32.mxu0 0.0
        %649 = vmatmul.mubr.f32.gmra.mrb[0].mxu0 %v559
        %v650 = vpop.f32.mrb[0].mxu0
        %v651 = vadd.f32 0.0, %v650
        %v652 = vpop.f32.mrb[0].mxu0
        %653 = vmatprep.mubr.f32.mxu0 0.0
        %654 = vmatmul.mubr.f32.gmra.mrb[0].mxu0 %v562
        %v655 = vpop.f32.mrb[0].mxu0
        %v656 = vadd.f32 0.0, %v655
        %v657 = vpop.f32.mrb[0].mxu0
        %658 = vmatprep.mubr.f32.mxu0 0.0
        %659 = vmatmul.mubr.f32.gmra.mrb[0].mxu0 %v565
        %v660 = vpop.f32.mrb[0].mxu0
        %v661 = vadd.f32 0.0, %v660
        %v662 = vpop.f32.mrb[0].mxu0
        %663 = vmatprep.mubr.f32.mxu0 0.0
        %664 = vmatmul.mubr.f32.gmra.mrb[0].mxu0 %v568
        %v665 = vpop.f32.mrb[0].mxu0
        %v666 = vadd.f32 0.0, %v665
        %v667 = vpop.f32.mrb[0].mxu0
        %668 = vmatprep.mubr.f32.mxu0 0.0
        %669 = vmatmul.mubr.f32.gmra.mrb[0].mxu0 %v571
        %v670 = vpop.f32.mrb[0].mxu0
        %v671 = vadd.f32 0.0, %v670
        %v672 = vpop.f32.mrb[0].mxu0
        %673 = vmatprep.mubr.f32.mxu0 0.0
        %674 = vmatmul.mubr.f32.gmra.mrb[0].mxu0 %v574
        %v675 = vpop.f32.mrb[0].mxu0
        %v676 = vadd.f32 0.0, %v675
        %v677 = vpop.f32.mrb[0].mxu0
        %678 = vmatprep.mubr.f32.mxu0 0.0
        %679 = vmatmul.mubr.f32.gmra.mrb[0].mxu0 %v577
        %v680 = vpop.f32.mrb[0].mxu0
        %v681 = vadd.f32 0.0, %v680
        %v682 = vpop.f32.mrb[0].mxu0
        %683 = vdwg.mxu0
        %v684 = vld [vmem:[#allocation7] sm:$0xff]
        %v685 = vld [vmem:[#allocation7 + $0x8] sm:$0xff]
        %v686 = vld [vmem:[#allocation7 + $0x10] sm:$0xff]
        %v687 = vld [vmem:[#allocation7 + $0x18] sm:$0xff]
        %v689 = vsel %vm426, %v406, 0
        %v692 = vsel %vm426, %v407, 0
        %v695 = vsel %vm426, %v408, 0
        %v698 = vsel %vm426, %v409, 0
        %v701 = vsel %vm426, %v410, 0
        %v704 = vsel %vm426, %v411, 0
        %v707 = vsel %vm426, %v412, 0
        %v710 = vsel %vm426, %v413, 0
        %712 = vmatprep.subr.mxu0 0.0
        %713 = vmatpush1.msra.mxu0 %v684
        %714 = vmatprep.subr.mxu0 0.0
        %715 = vmatpush1.msra.mxu0 %v685
        %716 = vmatprep.subr.mxu0 0.0
        %717 = vmatpush1.msra.mxu0 %v686
        %718 = vmatprep.subr.mxu0 0.0
        %719 = vmatpush1.msra.mxu0 %v687
        %720 = vmatprep.subr.mxu0 0.0
        %721 = vmatpush1.msra.mxu0 0.0
        %722 = vmatprep.subr.mxu0 0.0
        %723 = vmatpush1.msra.mxu0 0.0
        %724 = vmatprep.subr.mxu0 0.0
        %725 = vmatpush1.msra.mxu0 0.0
        %726 = vmatprep.subr.mxu0 0.0
        %727 = vmatpush1.msra.mxu0 0.0
        %728 = vmatprep.subr.mxu0 0.0
        %729 = vmatpush1.msra.mxu0 0.0
        %730 = vmatprep.subr.mxu0 0.0
        %731 = vmatpush1.msra.mxu0 0.0
        %732 = vmatprep.subr.mxu0 0.0
        %733 = vmatpush1.msra.mxu0 0.0
        %734 = vmatprep.subr.mxu0 0.0
        %735 = vmatpush1.msra.mxu0 0.0
        %736 = vmatprep.subr.mxu0 0.0
        %737 = vmatpush1.msra.mxu0 0.0
        %738 = vmatprep.subr.mxu0 0.0
        %739 = vmatpush1.msra.mxu0 0.0
        %740 = vmatprep.subr.mxu0 0.0
        %741 = vmatpush1.msra.mxu0 0.0
        %742 = vmatprep.subr.mxu0 0.0
        %743 = vmatpush1.msra.mxu0 0.0
        %744 = vmatprep.subr.mxu0 0.0
        %745 = vmatpush1.msra.mxu0 0.0
        %746 = vmatprep.subr.mxu0 0.0
        %747 = vmatpush1.msra.mxu0 0.0
        %748 = vmatprep.subr.mxu0 0.0
        %749 = vmatpush1.msra.mxu0 0.0
        %750 = vmatprep.subr.mxu0 0.0
        %751 = vmatpush1.msra.mxu0 0.0
        %752 = vmatprep.subr.mxu0 0.0
        %753 = vmatpush1.msra.mxu0 0.0
        %754 = vmatprep.subr.mxu0 0.0
        %755 = vmatpush1.msra.mxu0 0.0
        %756 = vmatprep.subr.mxu0 0.0
        %757 = vmatpush1.msra.mxu0 0.0
        %758 = vmatprep.subr.mxu0 0.0
        %759 = vmatpush1.msra.mxu0 0.0
        %760 = vmatprep.subr.mxu0 0.0
        %761 = vmatpush1.msra.mxu0 0.0
        %762 = vmatprep.subr.mxu0 0.0
        %763 = vmatpush1.msra.mxu0 0.0
        %764 = vmatprep.subr.mxu0 0.0
        %765 = vmatpush1.msra.mxu0 0.0
        %766 = vmatprep.subr.mxu0 0.0
        %767 = vmatpush1.msra.mxu0 0.0
        %768 = vmatprep.subr.mxu0 0.0
        %769 = vmatpush1.msra.mxu0 0.0
        %770 = vmatprep.subr.mxu0 0.0
        %771 = vmatpush1.msra.mxu0 0.0
        %772 = vmatprep.subr.mxu0 0.0
        %773 = vmatpush1.msra.mxu0 0.0
        %774 = vmatprep.subr.mxu0 0.0
        %775 = vmatpush1.msra.mxu0 0.0
        %776 = vmatprep.mubr.f32.mxu0 0.0
        %777 = vmatmul.mubr.f32.gmra.mrb[0].mxu0 %v689
        %v778 = vpop.f32.mrb[0].mxu0
        %v779 = vadd.f32 %v646, %v778
        %v780 = vpop.f32.mrb[0].mxu0
        %781 = vmatprep.mubr.f32.mxu0 0.0
        %782 = vmatmul.mubr.f32.gmra.mrb[0].mxu0 %v692
        %v783 = vpop.f32.mrb[0].mxu0
        %v784 = vadd.f32 %v651, %v783
        %v785 = vpop.f32.mrb[0].mxu0
        %786 = vmatprep.mubr.f32.mxu0 0.0
        %787 = vmatmul.mubr.f32.gmra.mrb[0].mxu0 %v695
        %v788 = vpop.f32.mrb[0].mxu0
        %v789 = vadd.f32 %v656, %v788
        %v790 = vpop.f32.mrb[0].mxu0
        %791 = vmatprep.mubr.f32.mxu0 0.0
        %792 = vmatmul.mubr.f32.gmra.mrb[0].mxu0 %v698
        %v793 = vpop.f32.mrb[0].mxu0
        %v794 = vadd.f32 %v661, %v793
        %v795 = vpop.f32.mrb[0].mxu0
        %796 = vmatprep.mubr.f32.mxu0 0.0
        %797 = vmatmul.mubr.f32.gmra.mrb[0].mxu0 %v701
        %v798 = vpop.f32.mrb[0].mxu0
        %v799 = vadd.f32 %v666, %v798
        %v800 = vpop.f32.mrb[0].mxu0
        %801 = vmatprep.mubr.f32.mxu0 0.0
        %802 = vmatmul.mubr.f32.gmra.mrb[0].mxu0 %v704
        %v803 = vpop.f32.mrb[0].mxu0
        %v804 = vadd.f32 %v671, %v803
        %v805 = vpop.f32.mrb[0].mxu0
        %806 = vmatprep.mubr.f32.mxu0 0.0
        %807 = vmatmul.mubr.f32.gmra.mrb[0].mxu0 %v707
        %v808 = vpop.f32.mrb[0].mxu0
        %v809 = vadd.f32 %v676, %v808
        %v810 = vpop.f32.mrb[0].mxu0
        %811 = vmatprep.mubr.f32.mxu0 0.0
        %812 = vmatmul.mubr.f32.gmra.mrb[0].mxu0 %v710
        %v813 = vpop.f32.mrb[0].mxu0
        %v814 = vadd.f32 %v681, %v813
        %v815 = vpop.f32.mrb[0].mxu0
        %816 = vdwg.mxu0
        %v817 = vmax.f32 %v779, 0.0
        %v818 = vmax.f32 %v784, 0.0
        %v819 = vmax.f32 %v789, 0.0
        %v820 = vmax.f32 %v794, 0.0
        %v821 = vmax.f32 %v799, 0.0
        %v822 = vmax.f32 %v804, 0.0
        %v823 = vmax.f32 %v809, 0.0
        %v824 = vmax.f32 %v814, 0.0
        %v825 = vld [vmem:[#allocation10] sm:$0xff]
        %v826 = vld [vmem:[#allocation10 + $0x8] sm:$0xff]
        %v827 = vld [vmem:[#allocation10 + $0x10] sm:$0xff]
        %v828 = vld [vmem:[#allocation10 + $0x18] sm:$0xff]
        %v829 = vld [vmem:[%s6] sm:$0x1]
        %v831 = vlaneseq
        %v832 = vshrl.u32 %v831, 7
        %v833 = vsub.s32 0, %v832
        %v834 = vrot.slane %v829, %v833
        %v837 = vsel %vm426, %v817, 0
        %v840 = vsel %vm426, %v818, 0
        %v843 = vsel %vm426, %v819, 0
        %v846 = vsel %vm426, %v820, 0
        %v849 = vsel %vm426, %v821, 0
        %v852 = vsel %vm426, %v822, 0
        %v855 = vsel %vm426, %v823, 0
        %v858 = vsel %vm426, %v824, 0
        %860 = vmatprep.subr.mxu0 0.0
        %861 = vmatpush1.msra.mxu0 %v825
        %862 = vmatprep.subr.mxu0 0.0
        %863 = vmatpush1.msra.mxu0 %v826
        %864 = vmatprep.subr.mxu0 0.0
        %865 = vmatpush1.msra.mxu0 %v827
        %866 = vmatprep.subr.mxu0 0.0
        %867 = vmatpush1.msra.mxu0 %v828
        %868 = vmatprep.subr.mxu0 0.0
        %869 = vmatpush1.msra.mxu0 0.0
        %870 = vmatprep.subr.mxu0 0.0
        %871 = vmatpush1.msra.mxu0 0.0
        %872 = vmatprep.subr.mxu0 0.0
        %873 = vmatpush1.msra.mxu0 0.0
        %874 = vmatprep.subr.mxu0 0.0
        %875 = vmatpush1.msra.mxu0 0.0
        %876 = vmatprep.subr.mxu0 0.0
        %877 = vmatpush1.msra.mxu0 0.0
        %878 = vmatprep.subr.mxu0 0.0
        %879 = vmatpush1.msra.mxu0 0.0
        %880 = vmatprep.subr.mxu0 0.0
        %881 = vmatpush1.msra.mxu0 0.0
        %882 = vmatprep.subr.mxu0 0.0
        %883 = vmatpush1.msra.mxu0 0.0
        %884 = vmatprep.subr.mxu0 0.0
        %885 = vmatpush1.msra.mxu0 0.0
        %886 = vmatprep.subr.mxu0 0.0
        %887 = vmatpush1.msra.mxu0 0.0
        %888 = vmatprep.subr.mxu0 0.0
        %889 = vmatpush1.msra.mxu0 0.0
        %890 = vmatprep.subr.mxu0 0.0
        %891 = vmatpush1.msra.mxu0 0.0
        %892 = vmatprep.subr.mxu0 0.0
        %893 = vmatpush1.msra.mxu0 0.0
        %894 = vmatprep.subr.mxu0 0.0
        %895 = vmatpush1.msra.mxu0 0.0
        %896 = vmatprep.subr.mxu0 0.0
        %897 = vmatpush1.msra.mxu0 0.0
        %898 = vmatprep.subr.mxu0 0.0
        %899 = vmatpush1.msra.mxu0 0.0
        %900 = vmatprep.subr.mxu0 0.0
        %901 = vmatpush1.msra.mxu0 0.0
        %902 = vmatprep.subr.mxu0 0.0
        %903 = vmatpush1.msra.mxu0 0.0
        %904 = vmatprep.subr.mxu0 0.0
        %905 = vmatpush1.msra.mxu0 0.0
        %906 = vmatprep.subr.mxu0 0.0
        %907 = vmatpush1.msra.mxu0 0.0
        %908 = vmatprep.subr.mxu0 0.0
        %909 = vmatpush1.msra.mxu0 0.0
        %910 = vmatprep.subr.mxu0 0.0
        %911 = vmatpush1.msra.mxu0 0.0
        %912 = vmatprep.subr.mxu0 0.0
        %913 = vmatpush1.msra.mxu0 0.0
        %914 = vmatprep.subr.mxu0 0.0
        %915 = vmatpush1.msra.mxu0 0.0
        %916 = vmatprep.subr.mxu0 0.0
        %917 = vmatpush1.msra.mxu0 0.0
        %918 = vmatprep.subr.mxu0 0.0
        %919 = vmatpush1.msra.mxu0 0.0
        %920 = vmatprep.subr.mxu0 0.0
        %921 = vmatpush1.msra.mxu0 0.0
        %922 = vmatprep.subr.mxu0 0.0
        %923 = vmatpush1.msra.mxu0 0.0
        %924 = vmatprep.mubr.f32.mxu0 0.0
        %925 = vmatmul.mubr.f32.gmra.mrb[0].mxu0 %v837
        %v926 = vpop.f32.mrb[0].mxu0
        %v927 = vadd.f32 %v834, %v926
        %v928 = vpop.f32.mrb[0].mxu0
        %929 = vmatprep.mubr.f32.mxu0 0.0
        %930 = vmatmul.mubr.f32.gmra.mrb[0].mxu0 %v840
        %v931 = vpop.f32.mrb[0].mxu0
        %v932 = vadd.f32 %v834, %v931
        %v933 = vpop.f32.mrb[0].mxu0
        %934 = vmatprep.mubr.f32.mxu0 0.0
        %935 = vmatmul.mubr.f32.gmra.mrb[0].mxu0 %v843
        %v936 = vpop.f32.mrb[0].mxu0
        %v937 = vadd.f32 %v834, %v936
        %v938 = vpop.f32.mrb[0].mxu0
        %939 = vmatprep.mubr.f32.mxu0 0.0
        %940 = vmatmul.mubr.f32.gmra.mrb[0].mxu0 %v846
        %v941 = vpop.f32.mrb[0].mxu0
        %v942 = vadd.f32 %v834, %v941
        %v943 = vpop.f32.mrb[0].mxu0
        %944 = vmatprep.mubr.f32.mxu0 0.0
        %945 = vmatmul.mubr.f32.gmra.mrb[0].mxu0 %v849
        %v946 = vpop.f32.mrb[0].mxu0
        %v947 = vadd.f32 %v834, %v946
        %v948 = vpop.f32.mrb[0].mxu0
        %949 = vmatprep.mubr.f32.mxu0 0.0
        %950 = vmatmul.mubr.f32.gmra.mrb[0].mxu0 %v852
        %v951 = vpop.f32.mrb[0].mxu0
        %v952 = vadd.f32 %v834, %v951
        %v953 = vpop.f32.mrb[0].mxu0
        %954 = vmatprep.mubr.f32.mxu0 0.0
        %955 = vmatmul.mubr.f32.gmra.mrb[0].mxu0 %v855
        %v956 = vpop.f32.mrb[0].mxu0
        %v957 = vadd.f32 %v834, %v956
        %v958 = vpop.f32.mrb[0].mxu0
        %959 = vmatprep.mubr.f32.mxu0 0.0
        %960 = vmatmul.mubr.f32.gmra.mrb[0].mxu0 %v858
        %v961 = vpop.f32.mrb[0].mxu0
        %v962 = vadd.f32 %v834, %v961
        %v963 = vpop.f32.mrb[0].mxu0
        %964 = vdwg.mxu0
        %v965 = vmax.f32 %v927, 0.0
        %v966 = vmax.f32 %v932, 0.0
        %v967 = vmax.f32 %v937, 0.0
        %v968 = vmax.f32 %v942, 0.0
        %v969 = vmax.f32 %v947, 0.0
        %v970 = vmax.f32 %v952, 0.0
        %v971 = vmax.f32 %v957, 0.0
        %v972 = vmax.f32 %v962, 0.0
        %v973 = vld [vmem:[%s7] sm:$0x1]
        %v975 = vlaneseq
        %v976 = vshrl.u32 %v975, 7
        %v977 = vsub.s32 0, %v976
        %v978 = vrot.slane %v973, %v977
        %v980 = vmul.f32 %v965, %v978
        %v981 = vmul.f32 %v966, %v978
        %v982 = vmul.f32 %v967, %v978
        %v983 = vmul.f32 %v968, %v978
        %v984 = vmul.f32 %v969, %v978
        %v985 = vmul.f32 %v970, %v978
        %v986 = vmul.f32 %v971, %v978
        %v987 = vmul.f32 %v972, %v978
        %v988 = vsel %vm426, %v980, 0.0
        %989 = vadd.xlane.f32.xlu0 %v988
        %v990 = vpop.xlane.xlu0 %989
        %v991 = vsel %vm426, %v981, 0.0
        %992 = vadd.xlane.f32.xlu0 %v991
        %v993 = vpop.xlane.xlu0 %992
        %v994 = vsel %vm426, %v982, 0.0
        %995 = vadd.xlane.f32.xlu0 %v994
        %v996 = vpop.xlane.xlu0 %995
        %v997 = vsel %vm426, %v983, 0.0
        %998 = vadd.xlane.f32.xlu0 %v997
        %v999 = vpop.xlane.xlu0 %998
        %v1000 = vsel %vm426, %v984, 0.0
        %1001 = vadd.xlane.f32.xlu0 %v1000
        %v1002 = vpop.xlane.xlu0 %1001
        %v1003 = vsel %vm426, %v985, 0.0
        %1004 = vadd.xlane.f32.xlu0 %v1003
        %v1005 = vpop.xlane.xlu0 %1004
        %v1006 = vsel %vm426, %v986, 0.0
        %1007 = vadd.xlane.f32.xlu0 %v1006
        %v1008 = vpop.xlane.xlu0 %1007
        %v1009 = vsel %vm426, %v987, 0.0
        %1010 = vadd.xlane.f32.xlu0 %v1009
        %v1011 = vpop.xlane.xlu0 %1010
        %v1012 = vrot.slane %v990, 4
        %v1013 = vmax.f32 %v990, %v1012
        %v1014 = vrot.slane %v1013, 2
        %v1015 = vmax.f32 %v1013, %v1014
        %v1016 = vrot.slane %v1015, 1
        %v1017 = vmax.f32 %v1015, %v1016
        %v1018 = vrot.slane %v993, 4
        %v1019 = vmax.f32 %v993, %v1018
        %v1020 = vrot.slane %v1019, 2
        %v1021 = vmax.f32 %v1019, %v1020
        %v1022 = vrot.slane %v1021, 1
        %v1023 = vmax.f32 %v1021, %v1022
        %v1024 = vrot.slane %v996, 4
        %v1025 = vmax.f32 %v996, %v1024
        %v1026 = vrot.slane %v1025, 2
        %v1027 = vmax.f32 %v1025, %v1026
        %v1028 = vrot.slane %v1027, 1
        %v1029 = vmax.f32 %v1027, %v1028
        %v1030 = vrot.slane %v999, 4
        %v1031 = vmax.f32 %v999, %v1030
        %v1032 = vrot.slane %v1031, 2
        %v1033 = vmax.f32 %v1031, %v1032
        %v1034 = vrot.slane %v1033, 1
        %v1035 = vmax.f32 %v1033, %v1034
        %v1036 = vrot.slane %v1002, 4
        %v1037 = vmax.f32 %v1002, %v1036
        %v1038 = vrot.slane %v1037, 2
        %v1039 = vmax.f32 %v1037, %v1038
        %v1040 = vrot.slane %v1039, 1
        %v1041 = vmax.f32 %v1039, %v1040
        %v1042 = vrot.slane %v1005, 4
        %v1043 = vmax.f32 %v1005, %v1042
        %v1044 = vrot.slane %v1043, 2
        %v1045 = vmax.f32 %v1043, %v1044
        %v1046 = vrot.slane %v1045, 1
        %v1047 = vmax.f32 %v1045, %v1046
        %v1048 = vrot.slane %v1008, 4
        %v1049 = vmax.f32 %v1008, %v1048
        %v1050 = vrot.slane %v1049, 2
        %v1051 = vmax.f32 %v1049, %v1050
        %v1052 = vrot.slane %v1051, 1
        %v1053 = vmax.f32 %v1051, %v1052
        %v1054 = vrot.slane %v1011, 4
        %v1055 = vmax.f32 %v1011, %v1054
        %v1056 = vrot.slane %v1055, 2
        %v1057 = vmax.f32 %v1055, %v1056
        %v1058 = vrot.slane %v1057, 1
        %v1059 = vmax.f32 %v1057, %v1058
        %v1060 = vsub.f32 %v990, %v1017
        %v1061 = vsub.f32 %v993, %v1023
        %v1062 = vsub.f32 %v996, %v1029
        %v1063 = vsub.f32 %v999, %v1035
        %v1064 = vsub.f32 %v1002, %v1041
        %v1065 = vsub.f32 %v1005, %v1047
        %v1066 = vsub.f32 %v1008, %v1053
        %v1067 = vsub.f32 %v1011, %v1059
        %v1068 = vmul.f32 %v1060, 1.442695
        %v1069 = vpow.pop %v1068
        %v1070 = vmul.f32 %v1061, 1.442695
        %v1071 = vpow.pop %v1070
        %v1072 = vmul.f32 %v1062, 1.442695
        %v1073 = vpow.pop %v1072
        %v1074 = vmul.f32 %v1063, 1.442695
        %v1075 = vpow.pop %v1074
        %v1076 = vmul.f32 %v1064, 1.442695
        %v1077 = vpow.pop %v1076
        %v1078 = vmul.f32 %v1065, 1.442695
        %v1079 = vpow.pop %v1078
        %v1080 = vmul.f32 %v1066, 1.442695
        %v1081 = vpow.pop %v1080
        %v1082 = vmul.f32 %v1067, 1.442695
        %v1083 = vpow.pop %v1082
        %v1084 = vrot.slane %v1069, 4
        %v1085 = vadd.f32 %v1069, %v1084
        %v1086 = vrot.slane %v1085, 2
        %v1087 = vadd.f32 %v1085, %v1086
        %v1088 = vrot.slane %v1087, 1
        %v1089 = vadd.f32 %v1087, %v1088
        %v1090 = vrot.slane %v1071, 4
        %v1091 = vadd.f32 %v1071, %v1090
        %v1092 = vrot.slane %v1091, 2
        %v1093 = vadd.f32 %v1091, %v1092
        %v1094 = vrot.slane %v1093, 1
        %v1095 = vadd.f32 %v1093, %v1094
        %v1096 = vrot.slane %v1073, 4
        %v1097 = vadd.f32 %v1073, %v1096
        %v1098 = vrot.slane %v1097, 2
        %v1099 = vadd.f32 %v1097, %v1098
        %v1100 = vrot.slane %v1099, 1
        %v1101 = vadd.f32 %v1099, %v1100
        %v1102 = vrot.slane %v1075, 4
        %v1103 = vadd.f32 %v1075, %v1102
        %v1104 = vrot.slane %v1103, 2
        %v1105 = vadd.f32 %v1103, %v1104
        %v1106 = vrot.slane %v1105, 1
        %v1107 = vadd.f32 %v1105, %v1106
        %v1108 = vrot.slane %v1077, 4
        %v1109 = vadd.f32 %v1077, %v1108
        %v1110 = vrot.slane %v1109, 2
        %v1111 = vadd.f32 %v1109, %v1110
        %v1112 = vrot.slane %v1111, 1
        %v1113 = vadd.f32 %v1111, %v1112
        %v1114 = vrot.slane %v1079, 4
        %v1115 = vadd.f32 %v1079, %v1114
        %v1116 = vrot.slane %v1115, 2
        %v1117 = vadd.f32 %v1115, %v1116
        %v1118 = vrot.slane %v1117, 1
        %v1119 = vadd.f32 %v1117, %v1118
        %v1120 = vrot.slane %v1081, 4
        %v1121 = vadd.f32 %v1081, %v1120
        %v1122 = vrot.slane %v1121, 2
        %v1123 = vadd.f32 %v1121, %v1122
        %v1124 = vrot.slane %v1123, 1
        %v1125 = vadd.f32 %v1123, %v1124
        %v1126 = vrot.slane %v1083, 4
        %v1127 = vadd.f32 %v1083, %v1126
        %v1128 = vrot.slane %v1127, 2
        %v1129 = vadd.f32 %v1127, %v1128
        %v1130 = vrot.slane %v1129, 1
        %v1131 = vadd.f32 %v1129, %v1130
        %v1132 = vrcp.pop %v1089
        %v1133 = vrcp.pop %v1095
        %v1134 = vrcp.pop %v1101
        %v1135 = vrcp.pop %v1107
        %v1136 = vrcp.pop %v1113
        %v1137 = vrcp.pop %v1119
        %v1138 = vrcp.pop %v1125
        %v1139 = vrcp.pop %v1131
        %v1140 = vmul.f32 %v1089, %v1132
        %v1141 = vmul.f32 %v1095, %v1133
        %v1142 = vmul.f32 %v1101, %v1134
        %v1143 = vmul.f32 %v1107, %v1135
        %v1144 = vmul.f32 %v1113, %v1136
        %v1145 = vmul.f32 %v1119, %v1137
        %v1146 = vmul.f32 %v1125, %v1138
        %v1147 = vmul.f32 %v1131, %v1139
        %v1148 = vsub.f32 2.0, %v1140
        %v1149 = vsub.f32 2.0, %v1141
        %v1150 = vsub.f32 2.0, %v1142
        %v1151 = vsub.f32 2.0, %v1143
        %v1152 = vsub.f32 2.0, %v1144
        %v1153 = vsub.f32 2.0, %v1145
        %v1154 = vsub.f32 2.0, %v1146
        %v1155 = vsub.f32 2.0, %v1147
        %v1156 = vmul.f32 %v1132, %v1148
        %v1157 = vmul.f32 %v1133, %v1149
        %v1158 = vmul.f32 %v1134, %v1150
        %v1159 = vmul.f32 %v1135, %v1151
        %v1160 = vmul.f32 %v1136, %v1152
        %v1161 = vmul.f32 %v1137, %v1153
        %v1162 = vmul.f32 %v1138, %v1154
        %v1163 = vmul.f32 %v1139, %v1155
        %v1164 = vmul.f32 %v1069, %v1156
        %v1165 = vmul.f32 %v1071, %v1157
        %v1166 = vmul.f32 %v1073, %v1158
        %v1167 = vmul.f32 %v1075, %v1159
        %v1168 = vmul.f32 %v1077, %v1160
        %v1169 = vmul.f32 %v1079, %v1161
        %v1170 = vmul.f32 %v1081, %v1162
        %v1171 = vmul.f32 %v1083, %v1163
        %v1172 = vmul.f32 %v1164, %v406
        %v1173 = vmul.f32 %v1165, %v407
        %v1174 = vmul.f32 %v1166, %v408
        %v1175 = vmul.f32 %v1167, %v409
        %v1176 = vmul.f32 %v1168, %v410
        %v1177 = vmul.f32 %v1169, %v411
        %v1178 = vmul.f32 %v1170, %v412
        %v1179 = vmul.f32 %v1171, %v413
        %v1180 = vsel %vm426, %v1172, 0.0
        %v1181 = vrot.slane %v1180, 4
        %v1182 = vadd.f32 %v1180, %v1181
        %v1183 = vrot.slane %v1182, 2
        %v1184 = vadd.f32 %v1182, %v1183
        %v1185 = vrot.slane %v1184, 1
        %v1186 = vadd.f32 %v1184, %v1185
        %v1187 = vsel %vm426, %v1173, 0.0
        %v1188 = vrot.slane %v1187, 4
        %v1189 = vadd.f32 %v1187, %v1188
        %v1190 = vrot.slane %v1189, 2
        %v1191 = vadd.f32 %v1189, %v1190
        %v1192 = vrot.slane %v1191, 1
        %v1193 = vadd.f32 %v1191, %v1192
        %v1194 = vsel %vm426, %v1174, 0.0
        %v1195 = vrot.slane %v1194, 4
        %v1196 = vadd.f32 %v1194, %v1195
        %v1197 = vrot.slane %v1196, 2
        %v1198 = vadd.f32 %v1196, %v1197
        %v1199 = vrot.slane %v1198, 1
        %v1200 = vadd.f32 %v1198, %v1199
        %v1201 = vsel %vm426, %v1175, 0.0
        %v1202 = vrot.slane %v1201, 4
        %v1203 = vadd.f32 %v1201, %v1202
        %v1204 = vrot.slane %v1203, 2
        %v1205 = vadd.f32 %v1203, %v1204
        %v1206 = vrot.slane %v1205, 1
        %v1207 = vadd.f32 %v1205, %v1206
        %v1208 = vsel %vm426, %v1176, 0.0
        %v1209 = vrot.slane %v1208, 4
        %v1210 = vadd.f32 %v1208, %v1209
        %v1211 = vrot.slane %v1210, 2
        %v1212 = vadd.f32 %v1210, %v1211
        %v1213 = vrot.slane %v1212, 1
        %v1214 = vadd.f32 %v1212, %v1213
        %v1215 = vsel %vm426, %v1177, 0.0
        %v1216 = vrot.slane %v1215, 4
        %v1217 = vadd.f32 %v1215, %v1216
        %v1218 = vrot.slane %v1217, 2
        %v1219 = vadd.f32 %v1217, %v1218
        %v1220 = vrot.slane %v1219, 1
        %v1221 = vadd.f32 %v1219, %v1220
        %v1222 = vsel %vm426, %v1178, 0.0
        %v1223 = vrot.slane %v1222, 4
        %v1224 = vadd.f32 %v1222, %v1223
        %v1225 = vrot.slane %v1224, 2
        %v1226 = vadd.f32 %v1224, %v1225
        %v1227 = vrot.slane %v1226, 1
        %v1228 = vadd.f32 %v1226, %v1227
        %v1229 = vsel %vm426, %v1179, 0.0
        %v1230 = vrot.slane %v1229, 4
        %v1231 = vadd.f32 %v1229, %v1230
        %v1232 = vrot.slane %v1231, 2
        %v1233 = vadd.f32 %v1231, %v1232
        %v1234 = vrot.slane %v1233, 1
        %v1235 = vadd.f32 %v1233, %v1234
        %vm1236 = vcmask 253952
        %1237 = vst.msk [vmem:[%s403] sm:$0x1] %vm1236, %v1186
        %1238 = vst.msk [vmem:[%s403 + $0x1] sm:$0x1] %vm1236, %v1193
        %1239 = vst.msk [vmem:[%s403 + $0x2] sm:$0x1] %vm1236, %v1200
        %1240 = vst.msk [vmem:[%s403 + $0x3] sm:$0x1] %vm1236, %v1207
        %1241 = vst.msk [vmem:[%s403 + $0x4] sm:$0x1] %vm1236, %v1214
        %1242 = vst.msk [vmem:[%s403 + $0x5] sm:$0x1] %vm1236, %v1221
        %1243 = vst.msk [vmem:[%s403 + $0x6] sm:$0x1] %vm1236, %v1228
        %1244 = vst.msk [vmem:[%s403 + $0x7] sm:$0x1] %vm1236, %v1235
        %s1245 = sand.u32 %s215, 1
        %s1246 = scalar_lea.sflag [#allocation4], %s1245
        %s1247 = sand.u32 %s215, 1
        %s1248 = smul.addr %s1247, 8
        %s1249 = scalar_lea.vmem [#allocation11], %s1248
        // Predicated region
        $region73: #{tpu_custom_call.1} parent=51 // pred_check
          %p1250 = pneg %p225
        $region74: #{tpu_custom_call.1} parent=51 // pred_check_branch
          %1252 = sbr.rel (%p1250) target = $region76
        $region75: #{tpu_custom_call.1} parent=51 // pred_region
          %s1253 = smul.u32 8, %s29
          %s1255 = ssub.s32 128, 128
          %1256 = vsyncadd %s1246, %s1255
          %s1257 = smul.addr %s1253, 16
          %s1258 = scalar_lea.hbm %s8, %s1257
          %s1259 = sshll.u32 %s1249, 4
          %s1260 = int_to_ptr.vmem [resolvable:$true] %s1259
          %1265 = dma.vmem_to_hbm [thread:$0]  %s1260, 128, %s1258, %s1246, 16, 16, 1
        $region76: #{tpu_custom_call.1} parent=51 // pred_fallthru
          _
      $region52: #{tpu_custom_call.1} parent=5 // pred_fallthru
        _
      %p1266 = scmp.le.s32.totalorder 2, %s24
      // Predicated region
      $region77: #{tpu_custom_call.1} parent=5 // pred_check
        %p1267 = pneg %p1266
      $region78: #{tpu_custom_call.1} parent=5 // pred_check_branch
        %1269 = sbr.rel (%p1267) target = $region80
      $region79: #{tpu_custom_call.1} parent=5 // pred_region
        %s1270 = ssub.s32 %s24, 2
        // Predicated region
        $region81: #{tpu_custom_call.1} parent=79 // pred_check
          %p1271 = pneg %p231
        $region82: #{tpu_custom_call.1} parent=79 // pred_check_branch
          %1273 = sbr.rel (%p1271) target = $region84
        $region83: #{tpu_custom_call.1} parent=79 // pred_region
          %s1274 = sand.u32 %s216, 1
          %s1275 = scalar_lea.sflag [#allocation4], %s1274
          %s1276 = sand.u32 %s216, 1
          %s1277 = smul.addr %s1276, 8
          %s1278 = scalar_lea.vmem [#allocation11], %s1277
          %1279 = dma.done %s1275, 128
        $region84: #{tpu_custom_call.1} parent=79 // pred_fallthru
          _
      $region80: #{tpu_custom_call.1} parent=5 // pred_fallthru
        _
    $region6: #{tpu_custom_call.1} parent=1 // loop_footer
      %s28 = sadd.s32 1, %s24
    $region7: #{tpu_custom_call.1} parent=1 // loop_footer_branch
      %23 = sbr.rel target = $region3
    $region8: #{tpu_custom_call.1} parent=1 // loop_exit
      _
    %1280 = vsyncpa [#allocation3], 1
    %s1281 = scalar_lea.sflag [#allocation3], 1
    %1282 = vsyncpa %s1281, 1
    %1283 = vsyncpa [#allocation6], 1
    %s1284 = scalar_lea.sflag [#allocation6], 1
    %1285 = vsyncpa %s1284, 1
    %1286 = vsyncpa [#allocation9], 1
    %1287 = vsyncpa [#allocation4], 1
    %s1288 = scalar_lea.sflag [#allocation4], 1
    %1289 = vsyncpa %s1288, 1

// kernel: tpu_custom_call.1
$region0: #{tpu_custom_call.1}
  #allocation0 [shape = 'u32[]', space=smem, size = 0x4, offset = 0x4, fixed_abs, tag = 'smem constant byte address 0x4 - core index']
  #allocation1 [shape = 'u32[144,128]{1,0:T(1,128)}', space=vmem, size = 0x12000, scoped, tag = 'internal scratch']
  %s0 = inlined_call_operand.hbm [shape: f32[16,8,32], index: 0, kind: input, shape index: {}]
  %s1 = inlined_call_operand.hbm [shape: f32[16,32], index: 1, kind: input, shape index: {}]
  %s2 = inlined_call_operand.hbm [shape: f32[32,32], index: 2, kind: input, shape index: {}]
  %s3 = inlined_call_operand.hbm [shape: f32[32,32], index: 3, kind: input, shape index: {}]
  %s4 = inlined_call_operand.vmem [shape: f32[1,32], index: 4, kind: input, shape index: {}]
  %s5 = inlined_call_operand.hbm [shape: f32[32,32], index: 5, kind: input, shape index: {}]
  %s6 = inlined_call_operand.vmem [shape: f32[1,32], index: 6, kind: input, shape index: {}]
  %s7 = inlined_call_operand.vmem [shape: f32[1,32], index: 7, kind: input, shape index: {}]
  %s8 = inlined_call_operand.hbm [shape: f32[16,1,32], index: 8, kind: output, shape index: {}]
  %s9 = sld [smem:[#allocation0]]
  $region85: #{tpu_custom_call.1} parent=0
    _
  %s11 = ssub.s32 1, %s9
  %s12 = scalar_select 0, %s11, %s9
  $region1: #{tpu_custom_call.1} parent=0
    #allocation2 [shape = 'u8[65536]{0}', space=vmem, size = 0x10000, scoped, tag = 'input window, operand 0']
    #allocation3 [shape = 's32[2]{0}', space=sflag, size = 0x8, scoped, tag = 'scoped memory for tpu_custom_call.1']
    #allocation4 [shape = 's32[2]{0}', space=sflag, size = 0x8, scoped, tag = 'scoped memory for tpu_custom_call.1']
    #allocation5 [shape = 'u8[8192]{0}', space=vmem, size = 0x2000, scoped, tag = 'input window, operand 1']
    #allocation6 [shape = 's32[2]{0}', space=sflag, size = 0x8, scoped, tag = 'scoped memory for tpu_custom_call.1']
    #allocation7 [shape = 'u8[16384]{0}', space=vmem, size = 0x4000, scoped, tag = 'input window, operand 2, single buffered']
    #allocation8 [shape = 'u8[16384]{0}', space=vmem, size = 0x4000, scoped, tag = 'input window, operand 3, single buffered']
    #allocation9 [shape = 's32[1]{0}', space=sflag, size = 0x4, scoped, tag = 'scoped memory for tpu_custom_call.1']
    #allocation10 [shape = 'u8[16384]{0}', space=vmem, size = 0x4000, scoped, tag = 'input window, operand 5, single buffered']
    #allocation11 [shape = 'u8[8192]{0}', space=vmem, size = 0x2000, scoped, tag = 'output window, operand 0']
    %13 = vsyncpa [#allocation3], 0
    %s14 = scalar_lea.sflag [#allocation3], 1
    %15 = vsyncpa %s14, 0
    %16 = vsyncpa [#allocation6], 0
    %s17 = scalar_lea.sflag [#allocation6], 1
    %18 = vsyncpa %s17, 0
    %19 = vsyncpa [#allocation9], 0
    %20 = vsyncpa [#allocation4], 0
    %s21 = scalar_lea.sflag [#allocation4], 1
    %22 = vsyncpa %s21, 0
    loop: start=0, step=1, limit=4
    $region2: #{tpu_custom_call.1} parent=1 // loop_pre_header
      _
    $region3: #{tpu_custom_call.1} parent=1 // loop_header
      %s24 = sphi 0, %s28
      %p25 = scmp.ge.s32.totalorder %s24, 4
      %s34 = sphi 0, %s36
      %s37 = sphi 0, %s34
      %s38 = sphi 0, %s37
      %s54 = sphi 0, %s38
      %s60 = sphi 0, %s62
      %s63 = sphi 0, %s60
      %s64 = sphi 0, %s63
      %s80 = sphi 0, %s64
      %s84 = sphi 0, %s84
      %s86 = sphi 0, %s84
      %s87 = sphi 0, %s86
      %s101 = sphi 0, %s87
      %s105 = sphi 0, %s105
      %s107 = sphi 0, %s105
      %s108 = sphi 0, %s107
      %s122 = sphi 0, %s108
      %s126 = sphi 0, %s126
      %s128 = sphi 0, %s126
      %s129 = sphi 0, %s128
      %s143 = sphi 0, %s129
      %s147 = sphi 0, %s147
      %s149 = sphi 0, %s147
      %s150 = sphi 0, %s149
      %s164 = sphi 0, %s150
      %s168 = sphi 0, %s168
      %s170 = sphi 0, %s168
      %s171 = sphi 0, %s170
      %s185 = sphi 0, %s171
      %s189 = sphi 0, %s189
      %s191 = sphi 0, %s189
      %s192 = sphi 0, %s191
      %s206 = sphi 0, %s192
      %s212 = sphi 0, %s214
      %s215 = sphi 0, %s212
      %s216 = sphi 0, %s215
      %s232 = sphi 0, %s216
    $region4: #{tpu_custom_call.1} parent=1 // loop_header_branch
      %27 = sbr.rel (%p25) target = $region8
    $region5: #{tpu_custom_call.1} parent=1 // loop_body
      %s29 = ssub.s32 %s24, 1
      %s30 = ssub.s32 %s24, 2
      %s31 = sadd.s32 %s24, 1
      %s32 = ssub.s32 %s24, %s31
      %p33 = scmp.eq.s32.totalorder %s32, 0
      %s35 = sadd.s32 %s34, 1
      %s36 = scalar_select %p33, %s34, %s35
      %p39 = pneg %p33
      %p40 = scmp.eq.s32.totalorder %s24, 1
      %p41 = por %p39, %p40
      %p42 = scmp.ne.s32.totalorder %s34, %s37
      %p43 = scmp.eq.s32.totalorder %s24, 0
      %p44 = por %p42, %p43
      %p45 = scmp.ne.s32.totalorder %s34, %s37
      %p46 = scmp.eq.s32.totalorder %s29, 1
      %p47 = por %p45, %p46
      %p48 = scmp.ne.s32.totalorder %s37, %s38
      %p49 = scmp.eq.s32.totalorder %s29, 0
      %p50 = por %p48, %p49
      %p51 = scmp.ne.s32.totalorder %s37, %s38
      %p52 = scmp.eq.s32.totalorder %s30, 1
      %p53 = por %p51, %p52
      %p55 = scmp.ne.s32.totalorder %s38, %s54
      %p56 = scmp.eq.s32.totalorder %s30, 0
      %p57 = por %p55, %p56
      %s58 = ssub.s32 %s24, %s31
      %p59 = scmp.eq.s32.totalorder %s58, 0
      %s61 = sadd.s32 %s60, 1
      %s62 = scalar_select %p59, %s60, %s61
      %p65 = pneg %p59
      %p66 = scmp.eq.s32.totalorder %s24, 1
      %p67 = por %p65, %p66
      %p68 = scmp.ne.s32.totalorder %s60, %s63
      %p69 = scmp.eq.s32.totalorder %s24, 0
      %p70 = por %p68, %p69
      %p71 = scmp.ne.s32.totalorder %s60, %s63
      %p72 = scmp.eq.s32.totalorder %s29, 1
      %p73 = por %p71, %p72
      %p74 = scmp.ne.s32.totalorder %s63, %s64
      %p75 = scmp.eq.s32.totalorder %s29, 0
      %p76 = por %p74, %p75
      %p77 = scmp.ne.s32.totalorder %s63, %s64
      %p78 = scmp.eq.s32.totalorder %s30, 1
      %p79 = por %p77, %p78
      %p81 = scmp.ne.s32.totalorder %s64, %s80
      %p82 = scmp.eq.s32.totalorder %s30, 0
      %p83 = por %p81, %p82
      %s85 = sadd.s32 %s84, 1
      %p88 = scmp.eq.s32.totalorder %s24, 1
      %p89 = scmp.ne.s32.totalorder %s84, %s86
      %p90 = scmp.eq.s32.totalorder %s24, 0
      %p91 = por %p89, %p90
      %p92 = scmp.ne.s32.totalorder %s84, %s86
      %p93 = scmp.eq.s32.totalorder %s29, 1
      %p94 = por %p92, %p93
      %p95 = scmp.ne.s32.totalorder %s86, %s87
      %p96 = scmp.eq.s32.totalorder %s29, 0
      %p97 = por %p95, %p96
      %p98 = scmp.ne.s32.totalorder %s86, %s87
      %p99 = scmp.eq.s32.totalorder %s30, 1
      %p100 = por %p98, %p99
      %p102 = scmp.ne.s32.totalorder %s87, %s101
      %p103 = scmp.eq.s32.totalorder %s30, 0
      %p104 = por %p102, %p103
      %s106 = sadd.s32 %s105, 1
      %p109 = scmp.eq.s32.totalorder %s24, 1
      %p110 = scmp.ne.s32.totalorder %s105, %s107
      %p111 = scmp.eq.s32.totalorder %s24, 0
      %p112 = por %p110, %p111
      %p113 = scmp.ne.s32.totalorder %s105, %s107
      %p114 = scmp.eq.s32.totalorder %s29, 1
      %p115 = por %p113, %p114
      %p116 = scmp.ne.s32.totalorder %s107, %s108
      %p117 = scmp.eq.s32.totalorder %s29, 0
      %p118 = por %p116, %p117
      %p119 = scmp.ne.s32.totalorder %s107, %s108
      %p120 = scmp.eq.s32.totalorder %s30, 1
      %p121 = por %p119, %p120
      %p123 = scmp.ne.s32.totalorder %s108, %s122
      %p124 = scmp.eq.s32.totalorder %s30, 0
      %p125 = por %p123, %p124
      %s127 = sadd.s32 %s126, 1
      %p130 = scmp.eq.s32.totalorder %s24, 1
      %p131 = scmp.ne.s32.totalorder %s126, %s128
      %p132 = scmp.eq.s32.totalorder %s24, 0
      %p133 = por %p131, %p132
      %p134 = scmp.ne.s32.totalorder %s126, %s128
      %p135 = scmp.eq.s32.totalorder %s29, 1
      %p136 = por %p134, %p135
      %p137 = scmp.ne.s32.totalorder %s128, %s129
      %p138 = scmp.eq.s32.totalorder %s29, 0
      %p139 = por %p137, %p138
      %p140 = scmp.ne.s32.totalorder %s128, %s129
      %p141 = scmp.eq.s32.totalorder %s30, 1
      %p142 = por %p140, %p141
      %p144 = scmp.ne.s32.totalorder %s129, %s143
      %p145 = scmp.eq.s32.totalorder %s30, 0
      %p146 = por %p144, %p145
      %s148 = sadd.s32 %s147, 1
      %p151 = scmp.eq.s32.totalorder %s24, 1
      %p152 = scmp.ne.s32.totalorder %s147, %s149
      %p153 = scmp.eq.s32.totalorder %s24, 0
      %p154 = por %p152, %p153
      %p155 = scmp.ne.s32.totalorder %s147, %s149
      %p156 = scmp.eq.s32.totalorder %s29, 1
      %p157 = por %p155, %p156
      %p158 = scmp.ne.s32.totalorder %s149, %s150
      %p159 = scmp.eq.s32.totalorder %s29, 0
      %p160 = por %p158, %p159
      %p161 = scmp.ne.s32.totalorder %s149, %s150
      %p162 = scmp.eq.s32.totalorder %s30, 1
      %p163 = por %p161, %p162
      %p165 = scmp.ne.s32.totalorder %s150, %s164
      %p166 = scmp.eq.s32.totalorder %s30, 0
      %p167 = por %p165, %p166
      %s169 = sadd.s32 %s168, 1
      %p172 = scmp.eq.s32.totalorder %s24, 1
      %p173 = scmp.ne.s32.totalorder %s168, %s170
      %p174 = scmp.eq.s32.totalorder %s24, 0
      %p175 = por %p173, %p174
      %p176 = scmp.ne.s32.totalorder %s168, %s170
      %p177 = scmp.eq.s32.totalorder %s29, 1
      %p178 = por %p176, %p177
      %p179 = scmp.ne.s32.totalorder %s170, %s171
      %p180 = scmp.eq.s32.totalorder %s29, 0
      %p181 = por %p179, %p180
      %p182 = scmp.ne.s32.totalorder %s170, %s171
      %p183 = scmp.eq.s32.totalorder %s30, 1
      %p184 = por %p182, %p183
      %p186 = scmp.ne.s32.totalorder %s171, %s185
      %p187 = scmp.eq.s32.totalorder %s30, 0
      %p188 = por %p186, %p187
      %s190 = sadd.s32 %s189, 1
      %p193 = scmp.eq.s32.totalorder %s24, 1
      %p194 = scmp.ne.s32.totalorder %s189, %s191
      %p195 = scmp.eq.s32.totalorder %s24, 0
      %p196 = por %p194, %p195
      %p197 = scmp.ne.s32.totalorder %s189, %s191
      %p198 = scmp.eq.s32.totalorder %s29, 1
      %p199 = por %p197, %p198
      %p200 = scmp.ne.s32.totalorder %s191, %s192
      %p201 = scmp.eq.s32.totalorder %s29, 0
      %p202 = por %p200, %p201
      %p203 = scmp.ne.s32.totalorder %s191, %s192
      %p204 = scmp.eq.s32.totalorder %s30, 1
      %p205 = por %p203, %p204
      %p207 = scmp.ne.s32.totalorder %s192, %s206
      %p208 = scmp.eq.s32.totalorder %s30, 0
      %p209 = por %p207, %p208
      %s210 = ssub.s32 %s24, %s31
      %p211 = scmp.eq.s32.totalorder %s210, 0
      %s213 = sadd.s32 %s212, 1
      %s214 = scalar_select %p211, %s212, %s213
      %p217 = pneg %p211
      %p218 = scmp.eq.s32.totalorder %s24, 1
      %p219 = por %p217, %p218
      %p220 = scmp.ne.s32.totalorder %s212, %s215
      %p221 = scmp.eq.s32.totalorder %s24, 0
      %p222 = por %p220, %p221
      %p223 = scmp.ne.s32.totalorder %s212, %s215
      %p224 = scmp.eq.s32.totalorder %s29, 1
      %p225 = por %p223, %p224
      %p226 = scmp.ne.s32.totalorder %s215, %s216
      %p227 = scmp.eq.s32.totalorder %s29, 0
      %p228 = por %p226, %p227
      %p229 = scmp.ne.s32.totalorder %s215, %s216
      %p230 = scmp.eq.s32.totalorder %s30, 1
      %p231 = por %p229, %p230
      %p233 = scmp.ne.s32.totalorder %s216, %s232
      %p234 = scmp.eq.s32.totalorder %s30, 0
      %p235 = por %p233, %p234
      %p236 = scmp.le.s32.totalorder 1, %s24
      %p237 = scmp.lt.s32.totalorder %s24, 3
      %p238 = pnand %p236, %p237
      %p239 = pneg %p238
      // Predicated region
      $region9: #{tpu_custom_call.1} parent=5 // pred_check
        _
      $region10: #{tpu_custom_call.1} parent=5 // pred_check_branch
        %241 = sbr.rel (%p238) target = $region12
      $region11: #{tpu_custom_call.1} parent=5 // pred_region
        %s242 = ssub.s32 %s24, 1
        // Predicated region
        $region13: #{tpu_custom_call.1} parent=11 // pred_check
          %p243 = pneg %p97
        $region14: #{tpu_custom_call.1} parent=11 // pred_check_branch
          %245 = sbr.rel (%p243) target = $region16
        $region15: #{tpu_custom_call.1} parent=11 // pred_region
          %s247 = ssub.s32 512, 512
          %248 = vsyncadd [#allocation6], %s247
          %s249 = sshll.u32 [#allocation7], 4
          %s250 = int_to_ptr.vmem [resolvable:$true] %s249
          %255 = dma.hbm_to_vmem [thread:$0]  %s2, 512, %s250, [#allocation6], 128, 128, 8
        $region16: #{tpu_custom_call.1} parent=11 // pred_fallthru
          _
        // Predicated region
        $region17: #{tpu_custom_call.1} parent=11 // pred_check
          %p256 = pneg %p118
        $region18: #{tpu_custom_call.1} parent=11 // pred_check_branch
          %258 = sbr.rel (%p256) target = $region20
        $region19: #{tpu_custom_call.1} parent=11 // pred_region
          %s260 = ssub.s32 512, 512
          %261 = vsyncadd [#allocation9], %s260
          %s262 = sshll.u32 [#allocation8], 4
          %s263 = int_to_ptr.vmem [resolvable:$true] %s262
          %268 = dma.hbm_to_vmem [thread:$0]  %s3, 512, %s263, [#allocation9], 128, 128, 8
        $region20: #{tpu_custom_call.1} parent=11 // pred_fallthru
          _
        // Predicated region
        $region21: #{tpu_custom_call.1} parent=11 // pred_check
          %p269 = pneg %p139
        $region22: #{tpu_custom_call.1} parent=11 // pred_check_branch
          %271 = sbr.rel (%p269) target = $region24
        $region23: #{tpu_custom_call.1} parent=11 // pred_region
          _
        $region24: #{tpu_custom_call.1} parent=11 // pred_fallthru
          _
        // Predicated region
        $region25: #{tpu_custom_call.1} parent=11 // pred_check
          %p272 = pneg %p160
        $region26: #{tpu_custom_call.1} parent=11 // pred_check_branch
          %274 = sbr.rel (%p272) target = $region28
        $region27: #{tpu_custom_call.1} parent=11 // pred_region
          %s276 = ssub.s32 512, 512
          %277 = vsyncadd [#allocation9], %s276
          %s278 = sshll.u32 [#allocation10], 4
          %s279 = int_to_ptr.vmem [resolvable:$true] %s278
          %284 = dma.hbm_to_vmem [thread:$0]  %s5, 512, %s279, [#allocation9], 128, 128, 8
        $region28: #{tpu_custom_call.1} parent=11 // pred_fallthru
          _
        // Predicated region
        $region29: #{tpu_custom_call.1} parent=11 // pred_check
          %p285 = pneg %p181
        $region30: #{tpu_custom_call.1} parent=11 // pred_check_branch
          %287 = sbr.rel (%p285) target = $region32
        $region31: #{tpu_custom_call.1} parent=11 // pred_region
          _
        $region32: #{tpu_custom_call.1} parent=11 // pred_fallthru
          _
        // Predicated region
        $region33: #{tpu_custom_call.1} parent=11 // pred_check
          %p288 = pneg %p202
        $region34: #{tpu_custom_call.1} parent=11 // pred_check_branch
          %290 = sbr.rel (%p288) target = $region36
        $region35: #{tpu_custom_call.1} parent=11 // pred_region
          _
        $region36: #{tpu_custom_call.1} parent=11 // pred_fallthru
          _
      $region12: #{tpu_custom_call.1} parent=5 // pred_fallthru
        _
      %p291 = scmp.lt.s32.totalorder %s24, 2
      // Predicated region
      $region37: #{tpu_custom_call.1} parent=5 // pred_check
        %p292 = pneg %p291
      $region38: #{tpu_custom_call.1} parent=5 // pred_check_branch
        %294 = sbr.rel (%p292) target = $region40
      $region39: #{tpu_custom_call.1} parent=5 // pred_region
        // Predicated region
        $region41: #{tpu_custom_call.1} parent=39 // pred_check
          %p295 = pneg %p44
        $region42: #{tpu_custom_call.1} parent=39 // pred_check_branch
          %297 = sbr.rel (%p295) target = $region44
        $region43: #{tpu_custom_call.1} parent=39 // pred_region
          %s298 = sand.u32 %s34, 1
          %s299 = scalar_lea.sflag [#allocation3], %s298
          %s300 = sand.u32 %s34, 1
          %s301 = smul.addr %s300, 64
          %s302 = scalar_lea.vmem [#allocation2], %s301
          %s303 = smul.u32 8, %s24
          %s305 = ssub.s32 1024, 1024
          %306 = vsyncadd %s299, %s305
          %s307 = smul.addr %s303, 128
          %s308 = scalar_lea.hbm %s0, %s307
          %s309 = sshll.u32 %s302, 4
          %s310 = int_to_ptr.vmem [resolvable:$true] %s309
          %315 = dma.hbm_to_vmem [thread:$0]  %s308, 1024, %s310, %s299, 128, 128, 8
        $region44: #{tpu_custom_call.1} parent=39 // pred_fallthru
          _
        // Predicated region
        $region45: #{tpu_custom_call.1} parent=39 // pred_check
          %p316 = pneg %p70
        $region46: #{tpu_custom_call.1} parent=39 // pred_check_branch
          %318 = sbr.rel (%p316) target = $region48
        $region47: #{tpu_custom_call.1} parent=39 // pred_region
          %s319 = sand.u32 %s24, 1
          %s320 = scalar_lea.sflag [#allocation6], %s319
          %s321 = sand.u32 %s60, 1
          %s322 = smul.addr %s321, 8
          %s323 = scalar_lea.vmem [#allocation5], %s322
          %s325 = ssub.s32 128, 128
          %326 = vsyncadd %s320, %s325
          %s327 = smul.addr %s24, 128
          %s328 = scalar_lea.hbm %s1, %s327
          %s330 = sshll.u32 %s323, 4
          %s331 = int_to_ptr.vmem [resolvable:$true] %s330
          %333 = dma.hbm_to_vmem [thread:$0]  %s328, 128, %s331, %s320
        $region48: #{tpu_custom_call.1} parent=39 // pred_fallthru
          _
      $region40: #{tpu_custom_call.1} parent=5 // pred_fallthru
        _
      %p334 = scmp.le.s32.totalorder 1, %s24
      %p335 = scmp.lt.s32.totalorder %s24, 3
      %p336 = pnand %p334, %p335
      %p337 = pneg %p336
      // Predicated region
      $region49: #{tpu_custom_call.1} parent=5 // pred_check
        _
      $region50: #{tpu_custom_call.1} parent=5 // pred_check_branch
        %339 = sbr.rel (%p336) target = $region52
      $region51: #{tpu_custom_call.1} parent=5 // pred_region
        %s340 = ssub.s32 %s24, 1
        %s341 = sand.u32 %s37, 1
        %s342 = scalar_lea.sflag [#allocation3], %s341
        %s343 = sand.u32 %s37, 1
        %s344 = smul.addr %s343, 64
        %s345 = scalar_lea.vmem [#allocation2], %s344
        // Predicated region
        $region53: #{tpu_custom_call.1} parent=51 // pred_check
          %p346 = pneg %p50
        $region54: #{tpu_custom_call.1} parent=51 // pred_check_branch
          %348 = sbr.rel (%p346) target = $region56
        $region55: #{tpu_custom_call.1} parent=51 // pred_region
          %349 = dma.done %s342, 1024
        $region56: #{tpu_custom_call.1} parent=51 // pred_fallthru
          _
        %s350 = sand.u32 %s29, 1
        %s351 = scalar_lea.sflag [#allocation6], %s350
        %s352 = sand.u32 %s63, 1
        %s353 = smul.addr %s352, 8
        %s354 = scalar_lea.vmem [#allocation5], %s353
        // Predicated region
        $region57: #{tpu_custom_call.1} parent=51 // pred_check
          %p355 = pneg %p76
        $region58: #{tpu_custom_call.1} parent=51 // pred_check_branch
          %357 = sbr.rel (%p355) target = $region60
        $region59: #{tpu_custom_call.1} parent=51 // pred_region
          %358 = dma.done %s351, 128
        $region60: #{tpu_custom_call.1} parent=51 // pred_fallthru
          _
        // Predicated region
        $region61: #{tpu_custom_call.1} parent=51 // pred_check
          %p359 = pneg %p97
        $region62: #{tpu_custom_call.1} parent=51 // pred_check_branch
          %361 = sbr.rel (%p359) target = $region64
        $region63: #{tpu_custom_call.1} parent=51 // pred_region
          %362 = dma.done [#allocation6], 512
        $region64: #{tpu_custom_call.1} parent=51 // pred_fallthru
          _
        // Predicated region
        $region65: #{tpu_custom_call.1} parent=51 // pred_check
          %p363 = pneg %p118
        $region66: #{tpu_custom_call.1} parent=51 // pred_check_branch
          %365 = sbr.rel (%p363) target = $region68
        $region67: #{tpu_custom_call.1} parent=51 // pred_region
          %366 = dma.done [#allocation9], 512
        $region68: #{tpu_custom_call.1} parent=51 // pred_fallthru
          _
        // Predicated region
        $region69: #{tpu_custom_call.1} parent=51 // pred_check
          %p367 = pneg %p160
        $region70: #{tpu_custom_call.1} parent=51 // pred_check_branch
          %369 = sbr.rel (%p367) target = $region72
        $region71: #{tpu_custom_call.1} parent=51 // pred_region
          %370 = dma.done [#allocation9], 512
        $region72: #{tpu_custom_call.1} parent=51 // pred_fallthru
          _
        %s371 = sand.u32 %s37, 1
        %s372 = scalar_lea.sflag [#allocation3], %s371
        %s373 = sand.u32 %s37, 1
        %s374 = smul.addr %s373, 64
        %s375 = scalar_lea.vmem [#allocation2], %s374
        %p376 = pneg %p50
        %p377 = pneg %p47
        %s378 = sand.u32 %s29, 1
        %s379 = scalar_lea.sflag [#allocation6], %s378
        %s380 = sand.u32 %s63, 1
        %s381 = smul.addr %s380, 8
        %s382 = scalar_lea.vmem [#allocation5], %s381
        %p383 = pneg %p76
        %p384 = pneg %p73
        %p385 = pneg %p97
        %p386 = pneg %p94
        %p387 = pneg %p118
        %p388 = pneg %p115
        %p389 = pneg %p139
        %p390 = pneg %p136
        %p391 = pneg %p160
        %p392 = pneg %p157
        %p393 = pneg %p181
        %p394 = pneg %p178
        %p395 = pneg %p202
        %p396 = pneg %p199
        %p397 = pneg %p228
        %p398 = pneg %p225
        %s399 = sand.u32 %s215, 1
        %s400 = scalar_lea.sflag [#allocation4], %s399
        %s401 = sand.u32 %s215, 1
        %s402 = smul.addr %s401, 8
        %s403 = scalar_lea.vmem [#allocation11], %s402
        %s404 = smul.u32 8, %s29
        %s405 = smul.u32 8, %s29
        %v406 = vld [vmem:[%s345] sm:$0xff]
        %v407 = vld [vmem:[%s345 + $0x8] sm:$0xff]
        %v408 = vld [vmem:[%s345 + $0x10] sm:$0xff]
        %v409 = vld [vmem:[%s345 + $0x18] sm:$0xff]
        %v410 = vld [vmem:[%s345 + $0x20] sm:$0xff]
        %v411 = vld [vmem:[%s345 + $0x28] sm:$0xff]
        %v412 = vld [vmem:[%s345 + $0x30] sm:$0xff]
        %v413 = vld [vmem:[%s345 + $0x38] sm:$0xff]
        %v414 = vld [vmem:[%s354] sm:$0xff]
        %v415 = vld [vmem:[#allocation8] sm:$0xff]
        %v416 = vld [vmem:[#allocation8 + $0x8] sm:$0xff]
        %v417 = vld [vmem:[#allocation8 + $0x10] sm:$0xff]
        %v418 = vld [vmem:[#allocation8 + $0x18] sm:$0xff]
        %v419 = vld [vmem:[%s4] sm:$0x1]
        %v421 = vlaneseq
        %v422 = vshrl.u32 %v421, 7
        %v423 = vsub.s32 0, %v422
        %v424 = vrot.slane %v419, %v423
        %vm426 = vcmask 261120
        %v428 = vsel %vm426, %v414, 0
        %430 = vmatprep.subr.mxu0 0.0
        %431 = vmatpush1.msra.mxu0 %v415
        %432 = vmatprep.subr.mxu0 0.0
        %433 = vmatpush1.msra.mxu0 %v416
        %434 = vmatprep.subr.mxu0 0.0
        %435 = vmatpush1.msra.mxu0 %v417
        %436 = vmatprep.subr.mxu0 0.0
        %437 = vmatpush1.msra.mxu0 %v418
        %438 = vmatprep.subr.mxu0 0.0
        %439 = vmatpush1.msra.mxu0 0.0
        %440 = vmatprep.subr.mxu0 0.0
        %441 = vmatpush1.msra.mxu0 0.0
        %442 = vmatprep.subr.mxu0 0.0
        %443 = vmatpush1.msra.mxu0 0.0
        %444 = vmatprep.subr.mxu0 0.0
        %445 = vmatpush1.msra.mxu0 0.0
        %446 = vmatprep.subr.mxu0 0.0
        %447 = vmatpush1.msra.mxu0 0.0
        %448 = vmatprep.subr.mxu0 0.0
        %449 = vmatpush1.msra.mxu0 0.0
        %450 = vmatprep.subr.mxu0 0.0
        %451 = vmatpush1.msra.mxu0 0.0
        %452 = vmatprep.subr.mxu0 0.0
        %453 = vmatpush1.msra.mxu0 0.0
        %454 = vmatprep.subr.mxu0 0.0
        %455 = vmatpush1.msra.mxu0 0.0
        %456 = vmatprep.subr.mxu0 0.0
        %457 = vmatpush1.msra.mxu0 0.0
        %458 = vmatprep.subr.mxu0 0.0
        %459 = vmatpush1.msra.mxu0 0.0
        %460 = vmatprep.subr.mxu0 0.0
        %461 = vmatpush1.msra.mxu0 0.0
        %462 = vmatprep.subr.mxu0 0.0
        %463 = vmatpush1.msra.mxu0 0.0
        %464 = vmatprep.subr.mxu0 0.0
        %465 = vmatpush1.msra.mxu0 0.0
        %466 = vmatprep.subr.mxu0 0.0
        %467 = vmatpush1.msra.mxu0 0.0
        %468 = vmatprep.subr.mxu0 0.0
        %469 = vmatpush1.msra.mxu0 0.0
        %470 = vmatprep.subr.mxu0 0.0
        %471 = vmatpush1.msra.mxu0 0.0
        %472 = vmatprep.subr.mxu0 0.0
        %473 = vmatpush1.msra.mxu0 0.0
        %474 = vmatprep.subr.mxu0 0.0
        %475 = vmatpush1.msra.mxu0 0.0
        %476 = vmatprep.subr.mxu0 0.0
        %477 = vmatpush1.msra.mxu0 0.0
        %478 = vmatprep.subr.mxu0 0.0
        %479 = vmatpush1.msra.mxu0 0.0
        %480 = vmatprep.subr.mxu0 0.0
        %481 = vmatpush1.msra.mxu0 0.0
        %482 = vmatprep.subr.mxu0 0.0
        %483 = vmatpush1.msra.mxu0 0.0
        %484 = vmatprep.subr.mxu0 0.0
        %485 = vmatpush1.msra.mxu0 0.0
        %486 = vmatprep.subr.mxu0 0.0
        %487 = vmatpush1.msra.mxu0 0.0
        %488 = vmatprep.subr.mxu0 0.0
        %489 = vmatpush1.msra.mxu0 0.0
        %490 = vmatprep.subr.mxu0 0.0
        %491 = vmatpush1.msra.mxu0 0.0
        %492 = vmatprep.subr.mxu0 0.0
        %493 = vmatpush1.msra.mxu0 0.0
        %494 = vmatprep.mubr.f32.mxu0 0.0
        %495 = vmatmul.mubr.f32.gmra.mrb[0].mxu0 %v428
        %v496 = vpop.f32.mrb[0].mxu0
        %v497 = vadd.f32 %v424, %v496
        %v498 = vpop.f32.mrb[0].mxu0
        %499 = vdwg.mxu0
        %v500 = vlaneseq
        %v501 = vshrl.u32 %v500, 7
        %v502 = vadd.s32 %v501, 8
        %v503 = vadd.s32 %v501, 16
        %v504 = vadd.s32 %v501, 24
        %v505 = vadd.s32 %v501, 32
        %v506 = vadd.s32 %v501, 40
        %v507 = vadd.s32 %v501, 48
        %v508 = vadd.s32 %v501, 56
        %v509 = vlaneseq
        %v510 = vand.u32 %v509, 127
        %v511 = vmul.u32 %v510, 8
        %vm512 = vcmp.ge.s32.totalorder %v501, %v511
        %vm513 = vcmp.ge.s32.totalorder %v502, %v511
        %vm514 = vcmp.ge.s32.totalorder %v503, %v511
        %vm515 = vcmp.ge.s32.totalorder %v504, %v511
        %vm516 = vcmp.ge.s32.totalorder %v505, %v511
        %vm517 = vcmp.ge.s32.totalorder %v506, %v511
        %vm518 = vcmp.ge.s32.totalorder %v507, %v511
        %vm519 = vcmp.ge.s32.totalorder %v508, %v511
        %v520 = vadd.s32 %v510, 1
        %v521 = vmul.u32 %v520, 8
        %vm522 = vcmp.lt.s32.totalorder %v501, %v521
        %vm523 = vcmp.lt.s32.totalorder %v502, %v521
        %vm524 = vcmp.lt.s32.totalorder %v503, %v521
        %vm525 = vcmp.lt.s32.totalorder %v504, %v521
        %vm526 = vcmp.lt.s32.totalorder %v505, %v521
        %vm527 = vcmp.lt.s32.totalorder %v506, %v521
        %vm528 = vcmp.lt.s32.totalorder %v507, %v521
        %vm529 = vcmp.lt.s32.totalorder %v508, %v521
        %vm530 = vmand %vm512, %vm522
        %vm531 = vmand %vm513, %vm523
        %vm532 = vmand %vm514, %vm524
        %vm533 = vmand %vm515, %vm525
        %vm534 = vmand %vm516, %vm526
        %vm535 = vmand %vm517, %vm527
        %vm536 = vmand %vm518, %vm528
        %vm537 = vmand %vm519, %vm529
        %v538 = vsel %vm530, 1, 0
        %v539 = vsel %vm531, 1, 0
        %v540 = vsel %vm532, 1, 0
        %v541 = vsel %vm533, 1, 0
        %v542 = vsel %vm534, 1, 0
        %v543 = vsel %vm535, 1, 0
        %v544 = vsel %vm536, 1, 0
        %v545 = vsel %vm537, 1, 0
        %v546 = vcvt.s32.f32 %v538
        %v547 = vcvt.s32.f32 %v539
        %v548 = vcvt.s32.f32 %v540
        %v549 = vcvt.s32.f32 %v541
        %v550 = vcvt.s32.f32 %v542
        %v551 = vcvt.s32.f32 %v543
        %v552 = vcvt.s32.f32 %v544
        %v553 = vcvt.s32.f32 %v545
        %vm554 = vcmask 64512
        %v556 = vsel %vm554, %v546, 0
        %v559 = vsel %vm554, %v547, 0
        %v562 = vsel %vm554, %v548, 0
        %v565 = vsel %vm554, %v549, 0
        %v568 = vsel %vm554, %v550, 0
        %v571 = vsel %vm554, %v551, 0
        %v574 = vsel %vm554, %v552, 0
        %v577 = vsel %vm554, %v553, 0
        %579 = vmatprep.subr.mxu0 0.0
        %580 = vmatpush1.msra.mxu0 %v497
        %581 = vmatprep.subr.mxu0 0.0
        %582 = vmatpush1.msra.mxu0 0.0
        %583 = vmatprep.subr.mxu0 0.0
        %584 = vmatpush1.msra.mxu0 0.0
        %585 = vmatprep.subr.mxu0 0.0
        %586 = vmatpush1.msra.mxu0 0.0
        %587 = vmatprep.subr.mxu0 0.0
        %588 = vmatpush1.msra.mxu0 0.0
        %589 = vmatprep.subr.mxu0 0.0
        %590 = vmatpush1.msra.mxu0 0.0
        %591 = vmatprep.subr.mxu0 0.0
        %592 = vmatpush1.msra.mxu0 0.0
        %593 = vmatprep.subr.mxu0 0.0
        %594 = vmatpush1.msra.mxu0 0.0
        %595 = vmatprep.subr.mxu0 0.0
        %596 = vmatpush1.msra.mxu0 0.0
        %597 = vmatprep.subr.mxu0 0.0
        %598 = vmatpush1.msra.mxu0 0.0
        %599 = vmatprep.subr.mxu0 0.0
        %600 = vmatpush1.msra.mxu0 0.0
        %601 = vmatprep.subr.mxu0 0.0
        %602 = vmatpush1.msra.mxu0 0.0
        %603 = vmatprep.subr.mxu0 0.0
        %604 = vmatpush1.msra.mxu0 0.0
        %605 = vmatprep.subr.mxu0 0.0
        %606 = vmatpush1.msra.mxu0 0.0
        %607 = vmatprep.subr.mxu0 0.0
        %608 = vmatpush1.msra.mxu0 0.0
        %609 = vmatprep.subr.mxu0 0.0
        %610 = vmatpush1.msra.mxu0 0.0
        %611 = vmatprep.subr.mxu0 0.0
        %612 = vmatpush1.msra.mxu0 0.0
        %613 = vmatprep.subr.mxu0 0.0
        %614 = vmatpush1.msra.mxu0 0.0
        %615 = vmatprep.subr.mxu0 0.0
        %616 = vmatpush1.msra.mxu0 0.0
        %617 = vmatprep.subr.mxu0 0.0
        %618 = vmatpush1.msra.mxu0 0.0
        %619 = vmatprep.subr.mxu0 0.0
        %620 = vmatpush1.msra.mxu0 0.0
        %621 = vmatprep.subr.mxu0 0.0
        %622 = vmatpush1.msra.mxu0 0.0
        %623 = vmatprep.subr.mxu0 0.0
        %624 = vmatpush1.msra.mxu0 0.0
        %625 = vmatprep.subr.mxu0 0.0
        %626 = vmatpush1.msra.mxu0 0.0
        %627 = vmatprep.subr.mxu0 0.0
        %628 = vmatpush1.msra.mxu0 0.0
        %629 = vmatprep.subr.mxu0 0.0
        %630 = vmatpush1.msra.mxu0 0.0
        %631 = vmatprep.subr.mxu0 0.0
        %632 = vmatpush1.msra.mxu0 0.0
        %633 = vmatprep.subr.mxu0 0.0
        %634 = vmatpush1.msra.mxu0 0.0
        %635 = vmatprep.subr.mxu0 0.0
        %636 = vmatpush1.msra.mxu0 0.0
        %637 = vmatprep.subr.mxu0 0.0
        %638 = vmatpush1.msra.mxu0 0.0
        %639 = vmatprep.subr.mxu0 0.0
        %640 = vmatpush1.msra.mxu0 0.0
        %641 = vmatprep.subr.mxu0 0.0
        %642 = vmatpush1.msra.mxu0 0.0
        %643 = vmatprep.mubr.f32.mxu0 0.0
        %644 = vmatmul.mubr.f32.gmra.mrb[0].mxu0 %v556
        %v645 = vpop.f32.mrb[0].mxu0
        %v646 = vadd.f32 0.0, %v645
        %v647 = vpop.f32.mrb[0].mxu0
        %648 = vmatprep.mubr.f32.mxu0 0.0
        %649 = vmatmul.mubr.f32.gmra.mrb[0].mxu0 %v559
        %v650 = vpop.f32.mrb[0].mxu0
        %v651 = vadd.f32 0.0, %v650
        %v652 = vpop.f32.mrb[0].mxu0
        %653 = vmatprep.mubr.f32.mxu0 0.0
        %654 = vmatmul.mubr.f32.gmra.mrb[0].mxu0 %v562
        %v655 = vpop.f32.mrb[0].mxu0
        %v656 = vadd.f32 0.0, %v655
        %v657 = vpop.f32.mrb[0].mxu0
        %658 = vmatprep.mubr.f32.mxu0 0.0
        %659 = vmatmul.mubr.f32.gmra.mrb[0].mxu0 %v565
        %v660 = vpop.f32.mrb[0].mxu0
        %v661 = vadd.f32 0.0, %v660
        %v662 = vpop.f32.mrb[0].mxu0
        %663 = vmatprep.mubr.f32.mxu0 0.0
        %664 = vmatmul.mubr.f32.gmra.mrb[0].mxu0 %v568
        %v665 = vpop.f32.mrb[0].mxu0
        %v666 = vadd.f32 0.0, %v665
        %v667 = vpop.f32.mrb[0].mxu0
        %668 = vmatprep.mubr.f32.mxu0 0.0
        %669 = vmatmul.mubr.f32.gmra.mrb[0].mxu0 %v571
        %v670 = vpop.f32.mrb[0].mxu0
        %v671 = vadd.f32 0.0, %v670
        %v672 = vpop.f32.mrb[0].mxu0
        %673 = vmatprep.mubr.f32.mxu0 0.0
        %674 = vmatmul.mubr.f32.gmra.mrb[0].mxu0 %v574
        %v675 = vpop.f32.mrb[0].mxu0
        %v676 = vadd.f32 0.0, %v675
        %v677 = vpop.f32.mrb[0].mxu0
        %678 = vmatprep.mubr.f32.mxu0 0.0
        %679 = vmatmul.mubr.f32.gmra.mrb[0].mxu0 %v577
        %v680 = vpop.f32.mrb[0].mxu0
        %v681 = vadd.f32 0.0, %v680
        %v682 = vpop.f32.mrb[0].mxu0
        %683 = vdwg.mxu0
        %v684 = vld [vmem:[#allocation7] sm:$0xff]
        %v685 = vld [vmem:[#allocation7 + $0x8] sm:$0xff]
        %v686 = vld [vmem:[#allocation7 + $0x10] sm:$0xff]
        %v687 = vld [vmem:[#allocation7 + $0x18] sm:$0xff]
        %v689 = vsel %vm426, %v406, 0
        %v692 = vsel %vm426, %v407, 0
        %v695 = vsel %vm426, %v408, 0
        %v698 = vsel %vm426, %v409, 0
        %v701 = vsel %vm426, %v410, 0
        %v704 = vsel %vm426, %v411, 0
        %v707 = vsel %vm426, %v412, 0
        %v710 = vsel %vm426, %v413, 0
        %712 = vmatprep.subr.mxu0 0.0
        %713 = vmatpush1.msra.mxu0 %v684
        %714 = vmatprep.subr.mxu0 0.0
        %715 = vmatpush1.msra.mxu0 %v685
        %716 = vmatprep.subr.mxu0 0.0
        %717 = vmatpush1.msra.mxu0 %v686
        %718 = vmatprep.subr.mxu0 0.0
        %719 = vmatpush1.msra.mxu0 %v687
        %720 = vmatprep.subr.mxu0 0.0
        %721 = vmatpush1.msra.mxu0 0.0
        %722 = vmatprep.subr.mxu0 0.0
        %723 = vmatpush1.msra.mxu0 0.0
        %724 = vmatprep.subr.mxu0 0.0
        %725 = vmatpush1.msra.mxu0 0.0
        %726 = vmatprep.subr.mxu0 0.0
        %727 = vmatpush1.msra.mxu0 0.0
        %728 = vmatprep.subr.mxu0 0.0
        %729 = vmatpush1.msra.mxu0 0.0
        %730 = vmatprep.subr.mxu0 0.0
        %731 = vmatpush1.msra.mxu0 0.0
        %732 = vmatprep.subr.mxu0 0.0
        %733 = vmatpush1.msra.mxu0 0.0
        %734 = vmatprep.subr.mxu0 0.0
        %735 = vmatpush1.msra.mxu0 0.0
        %736 = vmatprep.subr.mxu0 0.0
        %737 = vmatpush1.msra.mxu0 0.0
        %738 = vmatprep.subr.mxu0 0.0
        %739 = vmatpush1.msra.mxu0 0.0
        %740 = vmatprep.subr.mxu0 0.0
        %741 = vmatpush1.msra.mxu0 0.0
        %742 = vmatprep.subr.mxu0 0.0
        %743 = vmatpush1.msra.mxu0 0.0
        %744 = vmatprep.subr.mxu0 0.0
        %745 = vmatpush1.msra.mxu0 0.0
        %746 = vmatprep.subr.mxu0 0.0
        %747 = vmatpush1.msra.mxu0 0.0
        %748 = vmatprep.subr.mxu0 0.0
        %749 = vmatpush1.msra.mxu0 0.0
        %750 = vmatprep.subr.mxu0 0.0
        %751 = vmatpush1.msra.mxu0 0.0
        %752 = vmatprep.subr.mxu0 0.0
        %753 = vmatpush1.msra.mxu0 0.0
        %754 = vmatprep.subr.mxu0 0.0
        %755 = vmatpush1.msra.mxu0 0.0
        %756 = vmatprep.subr.mxu0 0.0
        %757 = vmatpush1.msra.mxu0 0.0
        %758 = vmatprep.subr.mxu0 0.0
        %759 = vmatpush1.msra.mxu0 0.0
        %760 = vmatprep.subr.mxu0 0.0
        %761 = vmatpush1.msra.mxu0 0.0
        %762 = vmatprep.subr.mxu0 0.0
        %763 = vmatpush1.msra.mxu0 0.0
        %764 = vmatprep.subr.mxu0 0.0
        %765 = vmatpush1.msra.mxu0 0.0
        %766 = vmatprep.subr.mxu0 0.0
        %767 = vmatpush1.msra.mxu0 0.0
        %768 = vmatprep.subr.mxu0 0.0
        %769 = vmatpush1.msra.mxu0 0.0
        %770 = vmatprep.subr.mxu0 0.0
        %771 = vmatpush1.msra.mxu0 0.0
        %772 = vmatprep.subr.mxu0 0.0
        %773 = vmatpush1.msra.mxu0 0.0
        %774 = vmatprep.subr.mxu0 0.0
        %775 = vmatpush1.msra.mxu0 0.0
        %776 = vmatprep.mubr.f32.mxu0 0.0
        %777 = vmatmul.mubr.f32.gmra.mrb[0].mxu0 %v689
        %v778 = vpop.f32.mrb[0].mxu0
        %v779 = vadd.f32 %v646, %v778
        %v780 = vpop.f32.mrb[0].mxu0
        %781 = vmatprep.mubr.f32.mxu0 0.0
        %782 = vmatmul.mubr.f32.gmra.mrb[0].mxu0 %v692
        %v783 = vpop.f32.mrb[0].mxu0
        %v784 = vadd.f32 %v651, %v783
        %v785 = vpop.f32.mrb[0].mxu0
        %786 = vmatprep.mubr.f32.mxu0 0.0
        %787 = vmatmul.mubr.f32.gmra.mrb[0].mxu0 %v695
        %v788 = vpop.f32.mrb[0].mxu0
        %v789 = vadd.f32 %v656, %v788
        %v790 = vpop.f32.mrb[0].mxu0
        %791 = vmatprep.mubr.f32.mxu0 0.0
        %792 = vmatmul.mubr.f32.gmra.mrb[0].mxu0 %v698
        %v793 = vpop.f32.mrb[0].mxu0
        %v794 = vadd.f32 %v661, %v793
        %v795 = vpop.f32.mrb[0].mxu0
        %796 = vmatprep.mubr.f32.mxu0 0.0
        %797 = vmatmul.mubr.f32.gmra.mrb[0].mxu0 %v701
        %v798 = vpop.f32.mrb[0].mxu0
        %v799 = vadd.f32 %v666, %v798
        %v800 = vpop.f32.mrb[0].mxu0
        %801 = vmatprep.mubr.f32.mxu0 0.0
        %802 = vmatmul.mubr.f32.gmra.mrb[0].mxu0 %v704
        %v803 = vpop.f32.mrb[0].mxu0
        %v804 = vadd.f32 %v671, %v803
        %v805 = vpop.f32.mrb[0].mxu0
        %806 = vmatprep.mubr.f32.mxu0 0.0
        %807 = vmatmul.mubr.f32.gmra.mrb[0].mxu0 %v707
        %v808 = vpop.f32.mrb[0].mxu0
        %v809 = vadd.f32 %v676, %v808
        %v810 = vpop.f32.mrb[0].mxu0
        %811 = vmatprep.mubr.f32.mxu0 0.0
        %812 = vmatmul.mubr.f32.gmra.mrb[0].mxu0 %v710
        %v813 = vpop.f32.mrb[0].mxu0
        %v814 = vadd.f32 %v681, %v813
        %v815 = vpop.f32.mrb[0].mxu0
        %816 = vdwg.mxu0
        %v817 = vmax.f32 %v779, 0.0
        %v818 = vmax.f32 %v784, 0.0
        %v819 = vmax.f32 %v789, 0.0
        %v820 = vmax.f32 %v794, 0.0
        %v821 = vmax.f32 %v799, 0.0
        %v822 = vmax.f32 %v804, 0.0
        %v823 = vmax.f32 %v809, 0.0
        %v824 = vmax.f32 %v814, 0.0
        %v825 = vld [vmem:[#allocation10] sm:$0xff]
        %v826 = vld [vmem:[#allocation10 + $0x8] sm:$0xff]
        %v827 = vld [vmem:[#allocation10 + $0x10] sm:$0xff]
        %v828 = vld [vmem:[#allocation10 + $0x18] sm:$0xff]
        %v829 = vld [vmem:[%s6] sm:$0x1]
        %v831 = vlaneseq
        %v832 = vshrl.u32 %v831, 7
        %v833 = vsub.s32 0, %v832
        %v834 = vrot.slane %v829, %v833
        %v837 = vsel %vm426, %v817, 0
        %v840 = vsel %vm426, %v818, 0
        %v843 = vsel %vm426, %v819, 0
        %v846 = vsel %vm426, %v820, 0
        %v849 = vsel %vm426, %v821, 0
        %v852 = vsel %vm426, %v822, 0
        %v855 = vsel %vm426, %v823, 0
        %v858 = vsel %vm426, %v824, 0
        %860 = vmatprep.subr.mxu0 0.0
        %861 = vmatpush1.msra.mxu0 %v825
        %862 = vmatprep.subr.mxu0 0.0
        %863 = vmatpush1.msra.mxu0 %v826
        %864 = vmatprep.subr.mxu0 0.0
        %865 = vmatpush1.msra.mxu0 %v827
        %866 = vmatprep.subr.mxu0 0.0
        %867 = vmatpush1.msra.mxu0 %v828
        %868 = vmatprep.subr.mxu0 0.0
        %869 = vmatpush1.msra.mxu0 0.0
        %870 = vmatprep.subr.mxu0 0.0
        %871 = vmatpush1.msra.mxu0 0.0
        %872 = vmatprep.subr.mxu0 0.0
        %873 = vmatpush1.msra.mxu0 0.0
        %874 = vmatprep.subr.mxu0 0.0
        %875 = vmatpush1.msra.mxu0 0.0
        %876 = vmatprep.subr.mxu0 0.0
        %877 = vmatpush1.msra.mxu0 0.0
        %878 = vmatprep.subr.mxu0 0.0
        %879 = vmatpush1.msra.mxu0 0.0
        %880 = vmatprep.subr.mxu0 0.0
        %881 = vmatpush1.msra.mxu0 0.0
        %882 = vmatprep.subr.mxu0 0.0
        %883 = vmatpush1.msra.mxu0 0.0
        %884 = vmatprep.subr.mxu0 0.0
        %885 = vmatpush1.msra.mxu0 0.0
        %886 = vmatprep.subr.mxu0 0.0
        %887 = vmatpush1.msra.mxu0 0.0
        %888 = vmatprep.subr.mxu0 0.0
        %889 = vmatpush1.msra.mxu0 0.0
        %890 = vmatprep.subr.mxu0 0.0
        %891 = vmatpush1.msra.mxu0 0.0
        %892 = vmatprep.subr.mxu0 0.0
        %893 = vmatpush1.msra.mxu0 0.0
        %894 = vmatprep.subr.mxu0 0.0
        %895 = vmatpush1.msra.mxu0 0.0
        %896 = vmatprep.subr.mxu0 0.0
        %897 = vmatpush1.msra.mxu0 0.0
        %898 = vmatprep.subr.mxu0 0.0
        %899 = vmatpush1.msra.mxu0 0.0
        %900 = vmatprep.subr.mxu0 0.0
        %901 = vmatpush1.msra.mxu0 0.0
        %902 = vmatprep.subr.mxu0 0.0
        %903 = vmatpush1.msra.mxu0 0.0
        %904 = vmatprep.subr.mxu0 0.0
        %905 = vmatpush1.msra.mxu0 0.0
        %906 = vmatprep.subr.mxu0 0.0
        %907 = vmatpush1.msra.mxu0 0.0
        %908 = vmatprep.subr.mxu0 0.0
        %909 = vmatpush1.msra.mxu0 0.0
        %910 = vmatprep.subr.mxu0 0.0
        %911 = vmatpush1.msra.mxu0 0.0
        %912 = vmatprep.subr.mxu0 0.0
        %913 = vmatpush1.msra.mxu0 0.0
        %914 = vmatprep.subr.mxu0 0.0
        %915 = vmatpush1.msra.mxu0 0.0
        %916 = vmatprep.subr.mxu0 0.0
        %917 = vmatpush1.msra.mxu0 0.0
        %918 = vmatprep.subr.mxu0 0.0
        %919 = vmatpush1.msra.mxu0 0.0
        %920 = vmatprep.subr.mxu0 0.0
        %921 = vmatpush1.msra.mxu0 0.0
        %922 = vmatprep.subr.mxu0 0.0
        %923 = vmatpush1.msra.mxu0 0.0
        %924 = vmatprep.mubr.f32.mxu0 0.0
        %925 = vmatmul.mubr.f32.gmra.mrb[0].mxu0 %v837
        %v926 = vpop.f32.mrb[0].mxu0
        %v927 = vadd.f32 %v834, %v926
        %v928 = vpop.f32.mrb[0].mxu0
        %929 = vmatprep.mubr.f32.mxu0 0.0
        %930 = vmatmul.mubr.f32.gmra.mrb[0].mxu0 %v840
        %v931 = vpop.f32.mrb[0].mxu0
        %v932 = vadd.f32 %v834, %v931
        %v933 = vpop.f32.mrb[0].mxu0
        %934 = vmatprep.mubr.f32.mxu0 0.0
        %935 = vmatmul.mubr.f32.gmra.mrb[0].mxu0 %v843
        %v936 = vpop.f32.mrb[0].mxu0
        %v937 = vadd.f32 %v834, %v936
        %v938 = vpop.f32.mrb[0].mxu0
        %939 = vmatprep.mubr.f32.mxu0 0.0
        %940 = vmatmul.mubr.f32.gmra.mrb[0].mxu0 %v846
        %v941 = vpop.f32.mrb[0].mxu0
        %v942 = vadd.f32 %v834, %v941
        %v943 = vpop.f32.mrb[0].mxu0
        %944 = vmatprep.mubr.f32.mxu0 0.0
        %945 = vmatmul.mubr.f32.gmra.mrb[0].mxu0 %v849
        %v946 = vpop.f32.mrb[0].mxu0
        %v947 = vadd.f32 %v834, %v946
        %v948 = vpop.f32.mrb[0].mxu0
        %949 = vmatprep.mubr.f32.mxu0 0.0
        %950 = vmatmul.mubr.f32.gmra.mrb[0].mxu0 %v852
        %v951 = vpop.f32.mrb[0].mxu0
        %v952 = vadd.f32 %v834, %v951
        %v953 = vpop.f32.mrb[0].mxu0
        %954 = vmatprep.mubr.f32.mxu0 0.0
        %955 = vmatmul.mubr.f32.gmra.mrb[0].mxu0 %v855
        %v956 = vpop.f32.mrb[0].mxu0
        %v957 = vadd.f32 %v834, %v956
        %v958 = vpop.f32.mrb[0].mxu0
        %959 = vmatprep.mubr.f32.mxu0 0.0
        %960 = vmatmul.mubr.f32.gmra.mrb[0].mxu0 %v858
        %v961 = vpop.f32.mrb[0].mxu0
        %v962 = vadd.f32 %v834, %v961
        %v963 = vpop.f32.mrb[0].mxu0
        %964 = vdwg.mxu0
        %v965 = vmax.f32 %v927, 0.0
        %v966 = vmax.f32 %v932, 0.0
        %v967 = vmax.f32 %v937, 0.0
        %v968 = vmax.f32 %v942, 0.0
        %v969 = vmax.f32 %v947, 0.0
        %v970 = vmax.f32 %v952, 0.0
        %v971 = vmax.f32 %v957, 0.0
        %v972 = vmax.f32 %v962, 0.0
        %v973 = vld [vmem:[%s7] sm:$0x1]
        %v975 = vlaneseq
        %v976 = vshrl.u32 %v975, 7
        %v977 = vsub.s32 0, %v976
        %v978 = vrot.slane %v973, %v977
        %v980 = vmul.f32 %v965, %v978
        %v981 = vmul.f32 %v966, %v978
        %v982 = vmul.f32 %v967, %v978
        %v983 = vmul.f32 %v968, %v978
        %v984 = vmul.f32 %v969, %v978
        %v985 = vmul.f32 %v970, %v978
        %v986 = vmul.f32 %v971, %v978
        %v987 = vmul.f32 %v972, %v978
        %v988 = vsel %vm426, %v980, 0.0
        %989 = vadd.xlane.f32.xlu0 %v988
        %v990 = vpop.xlane.xlu0 %989
        %v991 = vsel %vm426, %v981, 0.0
        %992 = vadd.xlane.f32.xlu0 %v991
        %v993 = vpop.xlane.xlu0 %992
        %v994 = vsel %vm426, %v982, 0.0
        %995 = vadd.xlane.f32.xlu0 %v994
        %v996 = vpop.xlane.xlu0 %995
        %v997 = vsel %vm426, %v983, 0.0
        %998 = vadd.xlane.f32.xlu0 %v997
        %v999 = vpop.xlane.xlu0 %998
        %v1000 = vsel %vm426, %v984, 0.0
        %1001 = vadd.xlane.f32.xlu0 %v1000
        %v1002 = vpop.xlane.xlu0 %1001
        %v1003 = vsel %vm426, %v985, 0.0
        %1004 = vadd.xlane.f32.xlu0 %v1003
        %v1005 = vpop.xlane.xlu0 %1004
        %v1006 = vsel %vm426, %v986, 0.0
        %1007 = vadd.xlane.f32.xlu0 %v1006
        %v1008 = vpop.xlane.xlu0 %1007
        %v1009 = vsel %vm426, %v987, 0.0
        %1010 = vadd.xlane.f32.xlu0 %v1009
        %v1011 = vpop.xlane.xlu0 %1010
        %v1012 = vrot.slane %v990, 4
        %v1013 = vmax.f32 %v990, %v1012
        %v1014 = vrot.slane %v1013, 2
        %v1015 = vmax.f32 %v1013, %v1014
        %v1016 = vrot.slane %v1015, 1
        %v1017 = vmax.f32 %v1015, %v1016
        %v1018 = vrot.slane %v993, 4
        %v1019 = vmax.f32 %v993, %v1018
        %v1020 = vrot.slane %v1019, 2
        %v1021 = vmax.f32 %v1019, %v1020
        %v1022 = vrot.slane %v1021, 1
        %v1023 = vmax.f32 %v1021, %v1022
        %v1024 = vrot.slane %v996, 4
        %v1025 = vmax.f32 %v996, %v1024
        %v1026 = vrot.slane %v1025, 2
        %v1027 = vmax.f32 %v1025, %v1026
        %v1028 = vrot.slane %v1027, 1
        %v1029 = vmax.f32 %v1027, %v1028
        %v1030 = vrot.slane %v999, 4
        %v1031 = vmax.f32 %v999, %v1030
        %v1032 = vrot.slane %v1031, 2
        %v1033 = vmax.f32 %v1031, %v1032
        %v1034 = vrot.slane %v1033, 1
        %v1035 = vmax.f32 %v1033, %v1034
        %v1036 = vrot.slane %v1002, 4
        %v1037 = vmax.f32 %v1002, %v1036
        %v1038 = vrot.slane %v1037, 2
        %v1039 = vmax.f32 %v1037, %v1038
        %v1040 = vrot.slane %v1039, 1
        %v1041 = vmax.f32 %v1039, %v1040
        %v1042 = vrot.slane %v1005, 4
        %v1043 = vmax.f32 %v1005, %v1042
        %v1044 = vrot.slane %v1043, 2
        %v1045 = vmax.f32 %v1043, %v1044
        %v1046 = vrot.slane %v1045, 1
        %v1047 = vmax.f32 %v1045, %v1046
        %v1048 = vrot.slane %v1008, 4
        %v1049 = vmax.f32 %v1008, %v1048
        %v1050 = vrot.slane %v1049, 2
        %v1051 = vmax.f32 %v1049, %v1050
        %v1052 = vrot.slane %v1051, 1
        %v1053 = vmax.f32 %v1051, %v1052
        %v1054 = vrot.slane %v1011, 4
        %v1055 = vmax.f32 %v1011, %v1054
        %v1056 = vrot.slane %v1055, 2
        %v1057 = vmax.f32 %v1055, %v1056
        %v1058 = vrot.slane %v1057, 1
        %v1059 = vmax.f32 %v1057, %v1058
        %v1060 = vsub.f32 %v990, %v1017
        %v1061 = vsub.f32 %v993, %v1023
        %v1062 = vsub.f32 %v996, %v1029
        %v1063 = vsub.f32 %v999, %v1035
        %v1064 = vsub.f32 %v1002, %v1041
        %v1065 = vsub.f32 %v1005, %v1047
        %v1066 = vsub.f32 %v1008, %v1053
        %v1067 = vsub.f32 %v1011, %v1059
        %v1068 = vmul.f32 %v1060, 1.442695
        %v1069 = vpow.pop %v1068
        %v1070 = vmul.f32 %v1061, 1.442695
        %v1071 = vpow.pop %v1070
        %v1072 = vmul.f32 %v1062, 1.442695
        %v1073 = vpow.pop %v1072
        %v1074 = vmul.f32 %v1063, 1.442695
        %v1075 = vpow.pop %v1074
        %v1076 = vmul.f32 %v1064, 1.442695
        %v1077 = vpow.pop %v1076
        %v1078 = vmul.f32 %v1065, 1.442695
        %v1079 = vpow.pop %v1078
        %v1080 = vmul.f32 %v1066, 1.442695
        %v1081 = vpow.pop %v1080
        %v1082 = vmul.f32 %v1067, 1.442695
        %v1083 = vpow.pop %v1082
        %v1084 = vrot.slane %v1069, 4
        %v1085 = vadd.f32 %v1069, %v1084
        %v1086 = vrot.slane %v1085, 2
        %v1087 = vadd.f32 %v1085, %v1086
        %v1088 = vrot.slane %v1087, 1
        %v1089 = vadd.f32 %v1087, %v1088
        %v1090 = vrot.slane %v1071, 4
        %v1091 = vadd.f32 %v1071, %v1090
        %v1092 = vrot.slane %v1091, 2
        %v1093 = vadd.f32 %v1091, %v1092
        %v1094 = vrot.slane %v1093, 1
        %v1095 = vadd.f32 %v1093, %v1094
        %v1096 = vrot.slane %v1073, 4
        %v1097 = vadd.f32 %v1073, %v1096
        %v1098 = vrot.slane %v1097, 2
        %v1099 = vadd.f32 %v1097, %v1098
        %v1100 = vrot.slane %v1099, 1
        %v1101 = vadd.f32 %v1099, %v1100
        %v1102 = vrot.slane %v1075, 4
        %v1103 = vadd.f32 %v1075, %v1102
        %v1104 = vrot.slane %v1103, 2
        %v1105 = vadd.f32 %v1103, %v1104
        %v1106 = vrot.slane %v1105, 1
        %v1107 = vadd.f32 %v1105, %v1106
        %v1108 = vrot.slane %v1077, 4
        %v1109 = vadd.f32 %v1077, %v1108
        %v1110 = vrot.slane %v1109, 2
        %v1111 = vadd.f32 %v1109, %v1110
        %v1112 = vrot.slane %v1111, 1
        %v1113 = vadd.f32 %v1111, %v1112
        %v1114 = vrot.slane %v1079, 4
        %v1115 = vadd.f32 %v1079, %v1114
        %v1116 = vrot.slane %v1115, 2
        %v1117 = vadd.f32 %v1115, %v1116
        %v1118 = vrot.slane %v1117, 1
        %v1119 = vadd.f32 %v1117, %v1118
        %v1120 = vrot.slane %v1081, 4
        %v1121 = vadd.f32 %v1081, %v1120
        %v1122 = vrot.slane %v1121, 2
        %v1123 = vadd.f32 %v1121, %v1122
        %v1124 = vrot.slane %v1123, 1
        %v1125 = vadd.f32 %v1123, %v1124
        %v1126 = vrot.slane %v1083, 4
        %v1127 = vadd.f32 %v1083, %v1126
        %v1128 = vrot.slane %v1127, 2
        %v1129 = vadd.f32 %v1127, %v1128
        %v1130 = vrot.slane %v1129, 1
        %v1131 = vadd.f32 %v1129, %v1130
        %v1132 = vrcp.pop %v1089
        %v1133 = vrcp.pop %v1095
        %v1134 = vrcp.pop %v1101
        %v1135 = vrcp.pop %v1107
        %v1136 = vrcp.pop %v1113
        %v1137 = vrcp.pop %v1119
        %v1138 = vrcp.pop %v1125
        %v1139 = vrcp.pop %v1131
        %v1140 = vmul.f32 %v1089, %v1132
        %v1141 = vmul.f32 %v1095, %v1133
        %v1142 = vmul.f32 %v1101, %v1134
        %v1143 = vmul.f32 %v1107, %v1135
        %v1144 = vmul.f32 %v1113, %v1136
        %v1145 = vmul.f32 %v1119, %v1137
        %v1146 = vmul.f32 %v1125, %v1138
        %v1147 = vmul.f32 %v1131, %v1139
        %v1148 = vsub.f32 2.0, %v1140
        %v1149 = vsub.f32 2.0, %v1141
        %v1150 = vsub.f32 2.0, %v1142
        %v1151 = vsub.f32 2.0, %v1143
        %v1152 = vsub.f32 2.0, %v1144
        %v1153 = vsub.f32 2.0, %v1145
        %v1154 = vsub.f32 2.0, %v1146
        %v1155 = vsub.f32 2.0, %v1147
        %v1156 = vmul.f32 %v1132, %v1148
        %v1157 = vmul.f32 %v1133, %v1149
        %v1158 = vmul.f32 %v1134, %v1150
        %v1159 = vmul.f32 %v1135, %v1151
        %v1160 = vmul.f32 %v1136, %v1152
        %v1161 = vmul.f32 %v1137, %v1153
        %v1162 = vmul.f32 %v1138, %v1154
        %v1163 = vmul.f32 %v1139, %v1155
        %v1164 = vmul.f32 %v1069, %v1156
        %v1165 = vmul.f32 %v1071, %v1157
        %v1166 = vmul.f32 %v1073, %v1158
        %v1167 = vmul.f32 %v1075, %v1159
        %v1168 = vmul.f32 %v1077, %v1160
        %v1169 = vmul.f32 %v1079, %v1161
        %v1170 = vmul.f32 %v1081, %v1162
        %v1171 = vmul.f32 %v1083, %v1163
        %v1172 = vmul.f32 %v1164, %v406
        %v1173 = vmul.f32 %v1165, %v407
        %v1174 = vmul.f32 %v1166, %v408
        %v1175 = vmul.f32 %v1167, %v409
        %v1176 = vmul.f32 %v1168, %v410
        %v1177 = vmul.f32 %v1169, %v411
        %v1178 = vmul.f32 %v1170, %v412
        %v1179 = vmul.f32 %v1171, %v413
        %v1180 = vsel %vm426, %v1172, 0.0
        %v1181 = vrot.slane %v1180, 4
        %v1182 = vadd.f32 %v1180, %v1181
        %v1183 = vrot.slane %v1182, 2
        %v1184 = vadd.f32 %v1182, %v1183
        %v1185 = vrot.slane %v1184, 1
        %v1186 = vadd.f32 %v1184, %v1185
        %v1187 = vsel %vm426, %v1173, 0.0
        %v1188 = vrot.slane %v1187, 4
        %v1189 = vadd.f32 %v1187, %v1188
        %v1190 = vrot.slane %v1189, 2
        %v1191 = vadd.f32 %v1189, %v1190
        %v1192 = vrot.slane %v1191, 1
        %v1193 = vadd.f32 %v1191, %v1192
        %v1194 = vsel %vm426, %v1174, 0.0
        %v1195 = vrot.slane %v1194, 4
        %v1196 = vadd.f32 %v1194, %v1195
        %v1197 = vrot.slane %v1196, 2
        %v1198 = vadd.f32 %v1196, %v1197
        %v1199 = vrot.slane %v1198, 1
        %v1200 = vadd.f32 %v1198, %v1199
        %v1201 = vsel %vm426, %v1175, 0.0
        %v1202 = vrot.slane %v1201, 4
        %v1203 = vadd.f32 %v1201, %v1202
        %v1204 = vrot.slane %v1203, 2
        %v1205 = vadd.f32 %v1203, %v1204
        %v1206 = vrot.slane %v1205, 1
        %v1207 = vadd.f32 %v1205, %v1206
        %v1208 = vsel %vm426, %v1176, 0.0
        %v1209 = vrot.slane %v1208, 4
        %v1210 = vadd.f32 %v1208, %v1209
        %v1211 = vrot.slane %v1210, 2
        %v1212 = vadd.f32 %v1210, %v1211
        %v1213 = vrot.slane %v1212, 1
        %v1214 = vadd.f32 %v1212, %v1213
        %v1215 = vsel %vm426, %v1177, 0.0
        %v1216 = vrot.slane %v1215, 4
        %v1217 = vadd.f32 %v1215, %v1216
        %v1218 = vrot.slane %v1217, 2
        %v1219 = vadd.f32 %v1217, %v1218
        %v1220 = vrot.slane %v1219, 1
        %v1221 = vadd.f32 %v1219, %v1220
        %v1222 = vsel %vm426, %v1178, 0.0
        %v1223 = vrot.slane %v1222, 4
        %v1224 = vadd.f32 %v1222, %v1223
        %v1225 = vrot.slane %v1224, 2
        %v1226 = vadd.f32 %v1224, %v1225
        %v1227 = vrot.slane %v1226, 1
        %v1228 = vadd.f32 %v1226, %v1227
        %v1229 = vsel %vm426, %v1179, 0.0
        %v1230 = vrot.slane %v1229, 4
        %v1231 = vadd.f32 %v1229, %v1230
        %v1232 = vrot.slane %v1231, 2
        %v1233 = vadd.f32 %v1231, %v1232
        %v1234 = vrot.slane %v1233, 1
        %v1235 = vadd.f32 %v1233, %v1234
        %vm1236 = vcmask 253952
        %1237 = vst.msk [vmem:[%s403] sm:$0x1] %vm1236, %v1186
        %1238 = vst.msk [vmem:[%s403 + $0x1] sm:$0x1] %vm1236, %v1193
        %1239 = vst.msk [vmem:[%s403 + $0x2] sm:$0x1] %vm1236, %v1200
        %1240 = vst.msk [vmem:[%s403 + $0x3] sm:$0x1] %vm1236, %v1207
        %1241 = vst.msk [vmem:[%s403 + $0x4] sm:$0x1] %vm1236, %v1214
        %1242 = vst.msk [vmem:[%s403 + $0x5] sm:$0x1] %vm1236, %v1221
        %1243 = vst.msk [vmem:[%s403 + $0x6] sm:$0x1] %vm1236, %v1228
        %1244 = vst.msk [vmem:[%s403 + $0x7] sm:$0x1] %vm1236, %v1235
        %s1245 = sand.u32 %s215, 1
        %s1246 = scalar_lea.sflag [#allocation4], %s1245
        %s1247 = sand.u32 %s215, 1
        %s1248 = smul.addr %s1247, 8
        %s1249 = scalar_lea.vmem [#allocation11], %s1248
        // Predicated region
        $region73: #{tpu_custom_call.1} parent=51 // pred_check
          %p1250 = pneg %p225
        $region74: #{tpu_custom_call.1} parent=51 // pred_check_branch
          %1252 = sbr.rel (%p1250) target = $region76
        $region75: #{tpu_custom_call.1} parent=51 // pred_region
          %s1253 = smul.u32 8, %s29
          %s1255 = ssub.s32 128, 128
          %1256 = vsyncadd %s1246, %s1255
          %s1257 = smul.addr %s1253, 16
          %s1258 = scalar_lea.hbm %s8, %s1257
          %s1259 = sshll.u32 %s1249, 4
          %s1260 = int_to_ptr.vmem [resolvable:$true] %s1259
          %1265 = dma.vmem_to_hbm [thread:$0]  %s1260, 128, %s1258, %s1246, 16, 16, 1
        $region76: #{tpu_custom_call.1} parent=51 // pred_fallthru
          _
      $region52: #{tpu_custom_call.1} parent=5 // pred_fallthru
        _
      %p1266 = scmp.le.s32.totalorder 2, %s24
      // Predicated region
      $region77: #{tpu_custom_call.1} parent=5 // pred_check
        %p1267 = pneg %p1266
      $region78: #{tpu_custom_call.1} parent=5 // pred_check_branch
        %1269 = sbr.rel (%p1267) target = $region80
      $region79: #{tpu_custom_call.1} parent=5 // pred_region
        %s1270 = ssub.s32 %s24, 2
        // Predicated region
        $region81: #{tpu_custom_call.1} parent=79 // pred_check
          %p1271 = pneg %p231
        $region82: #{tpu_custom_call.1} parent=79 // pred_check_branch
          %1273 = sbr.rel (%p1271) target = $region84
        $region83: #{tpu_custom_call.1} parent=79 // pred_region
          %s1274 = sand.u32 %s216, 1
          %s1275 = scalar_lea.sflag [#allocation4], %s1274
          %s1276 = sand.u32 %s216, 1
          %s1277 = smul.addr %s1276, 8
          %s1278 = scalar_lea.vmem [#allocation11], %s1277
          %1279 = dma.done %s1275, 128
        $region84: #{tpu_custom_call.1} parent=79 // pred_fallthru
          _
      $region80: #{tpu_custom_call.1} parent=5 // pred_fallthru
        _
    $region6: #{tpu_custom_call.1} parent=1 // loop_footer
      %s28 = sadd.s32 1, %s24
    $region7: #{tpu_custom_call.1} parent=1 // loop_footer_branch
      %23 = sbr.rel target = $region3
    $region8: #{tpu_custom_call.1} parent=1 // loop_exit
      _
    %1280 = vsyncpa [#allocation3], 1
    %s1281 = scalar_lea.sflag [#allocation3], 1
    %1282 = vsyncpa %s1281, 1
    %1283 = vsyncpa [#allocation6], 1
    %s1284 = scalar_lea.sflag [#allocation6], 1
    %1285 = vsyncpa %s1284, 1
    %1286 = vsyncpa [#allocation9], 1
    %1287 = vsyncpa [#allocation4], 1
    %s1288 = scalar_lea.sflag [#allocation4], 1
    %1289 = vsyncpa %s1288, 1

</llo_original>
